<compile_context>
chip_gen: v7x
topology: tpu7x:2x2x1
jax: 0.10.0
libtpu: 0.0.40
codegen_flags: <defaults>
</compile_context>

<pallas_src>
import jax
import jax.numpy as jnp
from jax.experimental import pallas as pl
from jax.experimental.pallas import tpu as pltpu

_BT = 128  # default batch tile (sweep 64-256; keep <=192 on v7x for headroom)


# ----------------------------- Pallas kernel -------------------------------

def _cnn_kernel(x_ref, m1_ref, b1_ref, s1_ref, m2_ref, b2_ref, s2_ref,
                wfc_ref, bfc_ref, out_ref, pad_ref):
    B = x_ref.shape[1]
    x = x_ref[...]                                               # (30,B,30) bf16

    # ---- conv1 (1->8 ch) + bias + ReLU : one dot, kh taps fused along K ----
    xin = jnp.concatenate([x[0:28], x[1:29], x[2:30]], axis=-1)  # (28,B,90)
    xin = xin.reshape(28 * B, 90)
    c1 = jnp.dot(xin, m1_ref[...], preferred_element_type=jnp.float32)
    c1 = jnp.maximum(c1 + b1_ref[...], 0.0)                      # (28B,224)

    # ---- maxpool 2x2 #1: H pair-max + merged even|odd W-selection matmul ---
    r1 = c1.reshape(14, 2, B, 224)
    c1h = jnp.maximum(r1[:, 0], r1[:, 1]).reshape(14 * B, 224).astype(jnp.bfloat16)
    d1 = jnp.dot(c1h, s1_ref[...], preferred_element_type=jnp.float32)  # (14B,256)
    p1 = jnp.maximum(d1[:, :128], d1[:, 128:])                   # (14B,128), W-pad baked

    # ---- H zero-pad for conv2 via persistent bf16 scratch (no concat copy) -
    zrow = jnp.zeros((1, B, 128), jnp.bfloat16)
    pad_ref[0:1] = zrow
    pad_ref[15:16] = zrow
    pad_ref[1:15] = p1.reshape(14, B, 128).astype(jnp.bfloat16)

    # ---- conv2 (8->16 ch) + bias + ReLU : one dot, kh taps fused along K ---
    xin2 = jnp.concatenate(
        [pad_ref[0:14], pad_ref[1:15], pad_ref[2:16]], axis=-1)  # (14,B,384)
    xin2 = xin2.reshape(14 * B, 384)
    c2 = jnp.dot(xin2, m2_ref[...], preferred_element_type=jnp.float32)
    c2 = jnp.maximum(c2 + b2_ref[...], 0.0)                      # (14B,224)

    # ---- maxpool 2x2 #2 -----------------------------------------------------
    r2 = c2.reshape(7, 2, B, 224)
    c2h = jnp.maximum(r2[:, 0], r2[:, 1]).reshape(7 * B, 224).astype(jnp.bfloat16)
    d2 = jnp.dot(c2h, s2_ref[...], preferred_element_type=jnp.float32)  # (7B,256)
    p2 = jnp.maximum(d2[:, :128], d2[:, 128:])                   # (7B,128), lanes>=112 are 0

    # ---- fc (784 -> 10, padded to 128 lanes): single K=896 dot -------------
    p2r = p2.reshape(7, B, 128).astype(jnp.bfloat16)
    fc_in = jnp.concatenate([p2r[h] for h in range(7)], axis=-1)  # (B,896)
    out_ref[...] = jnp.dot(fc_in, wfc_ref[...],
                           preferred_element_type=jnp.float32) + bfc_ref[...]


# ------------------- offline weight preparation (plain JAX) -----------------

def _prepare_params(params, mm_dtype=jnp.bfloat16):
    f32 = jnp.float32
    w1 = params["conv1_w"].astype(f32)                  # (8,1,3,3)  [co,ci,kh,kw]
    w2 = params["conv2_w"].astype(f32)                  # (16,8,3,3)

    # conv1 fused band matrix (3*30, 28*8): row kh*30+wi, col w*8+co.
    w1r = jnp.transpose(w1[:, 0], (1, 2, 0))            # (kh,kw,co)
    e1 = (jnp.arange(30)[None, :, None] ==
          (jnp.arange(28)[None, None, :] + jnp.arange(3)[:, None, None])).astype(f32)
    m1 = jnp.concatenate(
        [jnp.einsum("kiw,kc->iwc", e1, w1r[kh]).reshape(30, 28 * 8)
         for kh in range(3)], axis=0)                   # (90,224)

    # conv2 fused band matrix (3*128, 14*16): row kh*128 + wi*8+ci, col w*16+co.
    w2r = jnp.transpose(w2, (2, 3, 1, 0))               # (kh,kw,ci,co)
    e2 = (jnp.arange(16)[None, :, None] ==
          (jnp.arange(14)[None, None, :] + jnp.arange(3)[:, None, None])).astype(f32)
    m2 = jnp.concatenate(
        [jnp.einsum("kiw,kcd->icwd", e2, w2r[kh]).reshape(16 * 8, 14 * 16)
         for kh in range(3)], axis=0)                   # (384,224)

    # 0/1 W-pool selection; pool1 also places conv2's W zero-pad lanes.
    def _sel(w_in, w_out, c, off, pad):
        cols = jnp.arange(w_out) - pad
        sel = (jnp.arange(w_in)[:, None] == 2 * cols[None, :] + off).astype(f32)
        return jnp.kron(sel, jnp.eye(c, dtype=f32))
    s1 = jnp.concatenate([_sel(28, 16, 8, 0, 1), _sel(28, 16, 8, 1, 1)], axis=1)  # (224,256)
    s2e = jnp.pad(_sel(14, 7, 16, 0, 0), ((0, 0), (0, 16)))       # 112 -> 128 lanes
    s2o = jnp.pad(_sel(14, 7, 16, 1, 0), ((0, 0), (0, 16)))
    s2 = jnp.concatenate([s2e, s2o], axis=1)                       # (224,256)

    # fc: fold torch NCHW flatten order (c*49 + h*7 + w) into an (896,128) weight;
    # kernel fc-input lane = h*128 + w*16 + c (per-h lanes 112..127 are zero-pad).
    wfc = params["fc_w"].astype(f32).reshape(10, 16, 7, 7)         # (out,c,h,w)
    wfc = jnp.transpose(wfc, (2, 3, 1, 0)).reshape(7, 112, 10)     # (h, w*16+c, out)
    wfc = jnp.pad(wfc, ((0, 0), (0, 16), (0, 118))).reshape(896, 128)

    return dict(
        m1=m1.astype(mm_dtype),
        b1=jnp.tile(params["conv1_b"].astype(f32), 28).reshape(1, 224),
        s1=s1.astype(mm_dtype),
        m2=m2.astype(mm_dtype),
        b2=jnp.tile(params["conv2_b"].astype(f32), 14).reshape(1, 224),
        s2=s2.astype(mm_dtype),
        wfc=wfc.astype(mm_dtype),
        bfc=jnp.pad(params["fc_b"].astype(f32), (0, 118)).reshape(1, 128),
    )


# --------------------------------- model ------------------------------------

def init_params(key):
    """Deterministic synthetic params; torch-native shapes."""
    k1, k2, k3, k4, k5, k6 = jax.random.split(key, 6)
    return {
        "conv1_w": jax.random.normal(k1, (8, 1, 3, 3), jnp.float32) * 0.1,
        "conv1_b": jax.random.normal(k2, (8,), jnp.float32) * 0.1,
        "conv2_w": jax.random.normal(k3, (16, 8, 3, 3), jnp.float32) * 0.1,
        "conv2_b": jax.random.normal(k4, (16,), jnp.float32) * 0.1,
        "fc_w": jax.random.normal(k5, (10, 16 * 7 * 7), jnp.float32) * 0.05,
        "fc_b": jax.random.normal(k6, (10,), jnp.float32) * 0.05,
    }


def _round_up(v, m):
    return ((v + m - 1) // m) * m


def _pinned_spec(a):
    # Block == full array, constant index -> fetched once and kept resident.
    # (Optionally pipeline_mode=pl.Buffered(1) to drop the second buffer; the
    #  ~0.7 MiB saving is not needed at the default tile size.)
    return pl.BlockSpec(a.shape, lambda i: (0, 0))


def cnn_forward(params, x_nchw, *, batch_tile=_BT):
    prep = _prepare_params(params)
    n = x_nchw.shape[0]
    bt = _round_up(min(batch_tile, _round_up(n, 8)), 8)
    n_pad = _round_up(n, bt)

    # Input glue: squeeze channel, cast to bf16 (halves the streamed DMA),
    # pad batch, go to (H, N, W), zero-pad the spatial border for conv1.
    x = x_nchw.reshape(n, 28, 28).astype(jnp.bfloat16)
    if n_pad != n:
        x = jnp.pad(x, ((0, n_pad - n), (0, 0), (0, 0)))
    x = jnp.transpose(x, (1, 0, 2))                      # (28, Np, 28)
    x = jnp.pad(x, ((1, 1), (0, 0), (1, 1)))             # (30, Np, 30)

    # TODO(synk): on v7x verify the batch grid actually splits across both
    # TensorCores; if not, switch ("parallel",) -> (pltpu.CORE_PARALLEL,).
    out = pl.pallas_call(
        _cnn_kernel,
        out_shape=jax.ShapeDtypeStruct((n_pad, 128), jnp.float32),
        grid=(n_pad // bt,),
        in_specs=[
            pl.BlockSpec((30, bt, 30), lambda i: (0, i, 0)),
            _pinned_spec(prep["m1"]), _pinned_spec(prep["b1"]),
            _pinned_spec(prep["s1"]),
            _pinned_spec(prep["m2"]), _pinned_spec(prep["b2"]),
            _pinned_spec(prep["s2"]),
            _pinned_spec(prep["wfc"]), _pinned_spec(prep["bfc"]),
        ],
        out_specs=pl.BlockSpec((bt, 128), lambda i: (i, 0)),
        scratch_shapes=[pltpu.VMEM((16, bt, 128), jnp.bfloat16)],
        compiler_params=pltpu.CompilerParams(
            dimension_semantics=("parallel",),
            vmem_limit_bytes=48 * 1024 * 1024),
    )(x, prep["m1"], prep["b1"], prep["s1"],
      prep["m2"], prep["b2"], prep["s2"],
      prep["wfc"], prep["bfc"])
    return out[:n, :10]


if __name__ == "__main__":
    key = jax.random.PRNGKey(0)
    pkey, xkey = jax.random.split(key)
    params = init_params(pkey)
    # 28x28 spatial is required by fc in_features = 16*7*7; small batch = 2.
    x = jax.random.normal(xkey, (2, 1, 28, 28), jnp.float32)
    logits = jax.jit(cnn_forward)(params, x)
    jax.block_until_ready(logits)
    assert logits.shape == (2, 10), logits.shape
    print("KERNEL_OK")
</pallas_src>

<mosaic_0001>
module attributes {stable_mosaic.version = 11 : i64} {
  func.func @_cnn_kernel(%arg0: i32, %arg1: memref<30x8x30xbf16, #tpu.memory_space<vmem>>, %arg2: memref<90x224xbf16, #tpu.memory_space<vmem>>, %arg3: memref<1x224xf32, #tpu.memory_space<vmem>>, %arg4: memref<224x256xbf16, #tpu.memory_space<vmem>>, %arg5: memref<384x224xbf16, #tpu.memory_space<vmem>>, %arg6: memref<1x224xf32, #tpu.memory_space<vmem>>, %arg7: memref<224x256xbf16, #tpu.memory_space<vmem>>, %arg8: memref<896x128xbf16, #tpu.memory_space<vmem>>, %arg9: memref<1x128xf32, #tpu.memory_space<vmem>>, %arg10: memref<8x128xf32, #tpu.memory_space<vmem>>, %arg11: memref<16x8x128xbf16, #tpu.memory_space<vmem>>) attributes {dimension_semantics = [#tpu.dimension_semantics<parallel>], iteration_bounds = array<i64: 1>, scalar_prefetch = 0 : i64, scratch_operands = 1 : i64, tpu.core_type = #tpu.core_type<tc>, window_params = [{transform_indices = @transform_0, window_bounds = array<i64: 30, 8, 30>}, {pipeline_mode = #tpu.pipeline_mode<synchronous>, transform_indices = @transform_1, window_bounds = array<i64: 90, 224>}, {pipeline_mode = #tpu.pipeline_mode<synchronous>, transform_indices = @transform_2, window_bounds = array<i64: 1, 224>}, {pipeline_mode = #tpu.pipeline_mode<synchronous>, transform_indices = @transform_3, window_bounds = array<i64: 224, 256>}, {pipeline_mode = #tpu.pipeline_mode<synchronous>, transform_indices = @transform_4, window_bounds = array<i64: 384, 224>}, {pipeline_mode = #tpu.pipeline_mode<synchronous>, transform_indices = @transform_5, window_bounds = array<i64: 1, 224>}, {pipeline_mode = #tpu.pipeline_mode<synchronous>, transform_indices = @transform_6, window_bounds = array<i64: 224, 256>}, {pipeline_mode = #tpu.pipeline_mode<synchronous>, transform_indices = @transform_7, window_bounds = array<i64: 896, 128>}, {pipeline_mode = #tpu.pipeline_mode<synchronous>, transform_indices = @transform_8, window_bounds = array<i64: 1, 128>}, {transform_indices = @transform_9, window_bounds = array<i64: 8, 128>}]} {
    %c0 = arith.constant 0 : index
    %c0_0 = arith.constant 0 : index
    %c0_1 = arith.constant 0 : index
    %0 = vector.load %arg1[%c0, %c0_0, %c0_1] : memref<30x8x30xbf16, #tpu.memory_space<vmem>>, vector<30x8x30xbf16>
    %1 = vector.extract_strided_slice %0 {offsets = [0, 0, 0], sizes = [28, 8, 30], strides = [1, 1, 1]} : vector<30x8x30xbf16> to vector<28x8x30xbf16>
    %2 = vector.extract_strided_slice %0 {offsets = [1, 0, 0], sizes = [28, 8, 30], strides = [1, 1, 1]} : vector<30x8x30xbf16> to vector<28x8x30xbf16>
    %3 = vector.extract_strided_slice %0 {offsets = [2, 0, 0], sizes = [28, 8, 30], strides = [1, 1, 1]} : vector<30x8x30xbf16> to vector<28x8x30xbf16>
    %4 = tpu.concatenate %1, %2, %3 in 2 : vector<28x8x30xbf16>, vector<28x8x30xbf16>, vector<28x8x30xbf16> -> vector<28x8x90xbf16>
    %5 = vector.shape_cast %4 : vector<28x8x90xbf16> to vector<224x90xbf16>
    %c0_2 = arith.constant 0 : index
    %c0_3 = arith.constant 0 : index
    %6 = vector.load %arg2[%c0_2, %c0_3] : memref<90x224xbf16, #tpu.memory_space<vmem>>, vector<90x224xbf16>
    %cst = arith.constant dense<0.000000e+00> : vector<224x224xf32>
    %7 = tpu.matmul %5, %6, %cst {dimension_numbers = #tpu.dot_dimension_numbers<[1], [0], [0], [1], [0, 0, 1, 1], [], []>} : vector<224x90xbf16>, vector<90x224xbf16>, vector<224x224xf32> -> vector<224x224xf32>
    %c0_4 = arith.constant 0 : index
    %c0_5 = arith.constant 0 : index
    %8 = vector.load %arg3[%c0_4, %c0_5] : memref<1x224xf32, #tpu.memory_space<vmem>>, vector<1x224xf32>
    %9 = vector.broadcast %8 : vector<1x224xf32> to vector<224x224xf32>
    %10 = arith.addf %7, %9 : vector<224x224xf32>
    %cst_6 = arith.constant 0.000000e+00 : f32
    %11 = vector.broadcast %cst_6 : f32 to vector<224x224xf32>
    %12 = arith.maximumf %10, %11 : vector<224x224xf32>
    %13 = vector.shape_cast %12 : vector<224x224xf32> to vector<14x2x8x224xf32>
    %14 = vector.extract_strided_slice %13 {offsets = [0, 0, 0, 0], sizes = [14, 1, 8, 224], strides = [1, 1, 1, 1]} : vector<14x2x8x224xf32> to vector<14x1x8x224xf32>
    %15 = vector.shape_cast %14 : vector<14x1x8x224xf32> to vector<14x8x224xf32>
    %16 = vector.extract_strided_slice %13 {offsets = [0, 1, 0, 0], sizes = [14, 1, 8, 224], strides = [1, 1, 1, 1]} : vector<14x2x8x224xf32> to vector<14x1x8x224xf32>
    %17 = vector.shape_cast %16 : vector<14x1x8x224xf32> to vector<14x8x224xf32>
    %18 = arith.maximumf %15, %17 : vector<14x8x224xf32>
    %19 = vector.shape_cast %18 : vector<14x8x224xf32> to vector<112x224xf32>
    %20 = arith.truncf %19 : vector<112x224xf32> to vector<112x224xbf16>
    %c0_7 = arith.constant 0 : index
    %c0_8 = arith.constant 0 : index
    %21 = vector.load %arg4[%c0_7, %c0_8] : memref<224x256xbf16, #tpu.memory_space<vmem>>, vector<224x256xbf16>
    %cst_9 = arith.constant dense<0.000000e+00> : vector<112x256xf32>
    %22 = tpu.matmul %20, %21, %cst_9 {dimension_numbers = #tpu.dot_dimension_numbers<[1], [0], [0], [1], [0, 0, 1, 1], [], []>} : vector<112x224xbf16>, vector<224x256xbf16>, vector<112x256xf32> -> vector<112x256xf32>
    %23 = vector.extract_strided_slice %22 {offsets = [0, 0], sizes = [112, 128], strides = [1, 1]} : vector<112x256xf32> to vector<112x128xf32>
    %24 = vector.extract_strided_slice %22 {offsets = [0, 128], sizes = [112, 128], strides = [1, 1]} : vector<112x256xf32> to vector<112x128xf32>
    %25 = arith.maximumf %23, %24 : vector<112x128xf32>
    %cst_10 = arith.constant 0.000000e+00 : bf16
    %26 = vector.broadcast %cst_10 : bf16 to vector<1x8x128xbf16>
    %c0_11 = arith.constant 0 : index
    %c0_12 = arith.constant 0 : index
    %c0_13 = arith.constant 0 : index
    %27 = vector.load %arg11[%c0_11, %c0_12, %c0_13] : memref<16x8x128xbf16, #tpu.memory_space<vmem>>, vector<1x8x128xbf16>
    tpu.vector_store %arg11[%c0_11, %c0_12, %c0_13], %26 {strides = array<i32>} : memref<16x8x128xbf16, #tpu.memory_space<vmem>>, vector<1x8x128xbf16>,
    %c15 = arith.constant 15 : index
    %c0_14 = arith.constant 0 : index
    %c0_15 = arith.constant 0 : index
    %28 = vector.load %arg11[%c15, %c0_14, %c0_15] : memref<16x8x128xbf16, #tpu.memory_space<vmem>>, vector<1x8x128xbf16>
    tpu.vector_store %arg11[%c15, %c0_14, %c0_15], %26 {strides = array<i32>} : memref<16x8x128xbf16, #tpu.memory_space<vmem>>, vector<1x8x128xbf16>,
    %29 = vector.shape_cast %25 : vector<112x128xf32> to vector<14x8x128xf32>
    %30 = arith.truncf %29 : vector<14x8x128xf32> to vector<14x8x128xbf16>
    %c1 = arith.constant 1 : index
    %c0_16 = arith.constant 0 : index
    %c0_17 = arith.constant 0 : index
    %31 = vector.load %arg11[%c1, %c0_16, %c0_17] : memref<16x8x128xbf16, #tpu.memory_space<vmem>>, vector<14x8x128xbf16>
    tpu.vector_store %arg11[%c1, %c0_16, %c0_17], %30 {strides = array<i32>} : memref<16x8x128xbf16, #tpu.memory_space<vmem>>, vector<14x8x128xbf16>,
    %c0_18 = arith.constant 0 : index
    %c0_19 = arith.constant 0 : index
    %c0_20 = arith.constant 0 : index
    %32 = vector.load %arg11[%c0_18, %c0_19, %c0_20] : memref<16x8x128xbf16, #tpu.memory_space<vmem>>, vector<14x8x128xbf16>
    %c1_21 = arith.constant 1 : index
    %c0_22 = arith.constant 0 : index
    %c0_23 = arith.constant 0 : index
    %33 = vector.load %arg11[%c1_21, %c0_22, %c0_23] : memref<16x8x128xbf16, #tpu.memory_space<vmem>>, vector<14x8x128xbf16>
    %c2 = arith.constant 2 : index
    %c0_24 = arith.constant 0 : index
    %c0_25 = arith.constant 0 : index
    %34 = vector.load %arg11[%c2, %c0_24, %c0_25] : memref<16x8x128xbf16, #tpu.memory_space<vmem>>, vector<14x8x128xbf16>
    %35 = tpu.concatenate %32, %33, %34 in 2 : vector<14x8x128xbf16>, vector<14x8x128xbf16>, vector<14x8x128xbf16> -> vector<14x8x384xbf16>
    %36 = vector.shape_cast %35 : vector<14x8x384xbf16> to vector<112x384xbf16>
    %c0_26 = arith.constant 0 : index
    %c0_27 = arith.constant 0 : index
    %37 = vector.load %arg5[%c0_26, %c0_27] : memref<384x224xbf16, #tpu.memory_space<vmem>>, vector<384x224xbf16>
    %cst_28 = arith.constant dense<0.000000e+00> : vector<112x224xf32>
    %38 = tpu.matmul %36, %37, %cst_28 {dimension_numbers = #tpu.dot_dimension_numbers<[1], [0], [0], [1], [0, 0, 1, 1], [], []>} : vector<112x384xbf16>, vector<384x224xbf16>, vector<112x224xf32> -> vector<112x224xf32>
    %c0_29 = arith.constant 0 : index
    %c0_30 = arith.constant 0 : index
    %39 = vector.load %arg6[%c0_29, %c0_30] : memref<1x224xf32, #tpu.memory_space<vmem>>, vector<1x224xf32>
    %40 = vector.broadcast %39 : vector<1x224xf32> to vector<112x224xf32>
    %41 = arith.addf %38, %40 : vector<112x224xf32>
    %cst_31 = arith.constant 0.000000e+00 : f32
    %42 = vector.broadcast %cst_31 : f32 to vector<112x224xf32>
    %43 = arith.maximumf %41, %42 : vector<112x224xf32>
    %44 = vector.shape_cast %43 : vector<112x224xf32> to vector<7x2x8x224xf32>
    %45 = vector.extract_strided_slice %44 {offsets = [0, 0, 0, 0], sizes = [7, 1, 8, 224], strides = [1, 1, 1, 1]} : vector<7x2x8x224xf32> to vector<7x1x8x224xf32>
    %46 = vector.shape_cast %45 : vector<7x1x8x224xf32> to vector<7x8x224xf32>
    %47 = vector.extract_strided_slice %44 {offsets = [0, 1, 0, 0], sizes = [7, 1, 8, 224], strides = [1, 1, 1, 1]} : vector<7x2x8x224xf32> to vector<7x1x8x224xf32>
    %48 = vector.shape_cast %47 : vector<7x1x8x224xf32> to vector<7x8x224xf32>
    %49 = arith.maximumf %46, %48 : vector<7x8x224xf32>
    %50 = vector.shape_cast %49 : vector<7x8x224xf32> to vector<56x224xf32>
    %51 = arith.truncf %50 : vector<56x224xf32> to vector<56x224xbf16>
    %c0_32 = arith.constant 0 : index
    %c0_33 = arith.constant 0 : index
    %52 = vector.load %arg7[%c0_32, %c0_33] : memref<224x256xbf16, #tpu.memory_space<vmem>>, vector<224x256xbf16>
    %cst_34 = arith.constant dense<0.000000e+00> : vector<56x256xf32>
    %53 = tpu.matmul %51, %52, %cst_34 {dimension_numbers = #tpu.dot_dimension_numbers<[1], [0], [0], [1], [0, 0, 1, 1], [], []>} : vector<56x224xbf16>, vector<224x256xbf16>, vector<56x256xf32> -> vector<56x256xf32>
    %54 = vector.extract_strided_slice %53 {offsets = [0, 0], sizes = [56, 128], strides = [1, 1]} : vector<56x256xf32> to vector<56x128xf32>
    %55 = vector.extract_strided_slice %53 {offsets = [0, 128], sizes = [56, 128], strides = [1, 1]} : vector<56x256xf32> to vector<56x128xf32>
    %56 = arith.maximumf %54, %55 : vector<56x128xf32>
    %57 = vector.shape_cast %56 : vector<56x128xf32> to vector<7x8x128xf32>
    %58 = arith.truncf %57 : vector<7x8x128xf32> to vector<7x8x128xbf16>
    %59 = vector.extract_strided_slice %58 {offsets = [0, 0, 0], sizes = [1, 8, 128], strides = [1, 1, 1]} : vector<7x8x128xbf16> to vector<1x8x128xbf16>
    %60 = vector.shape_cast %59 : vector<1x8x128xbf16> to vector<8x128xbf16>
    %61 = vector.extract_strided_slice %58 {offsets = [1, 0, 0], sizes = [1, 8, 128], strides = [1, 1, 1]} : vector<7x8x128xbf16> to vector<1x8x128xbf16>
    %62 = vector.shape_cast %61 : vector<1x8x128xbf16> to vector<8x128xbf16>
    %63 = vector.extract_strided_slice %58 {offsets = [2, 0, 0], sizes = [1, 8, 128], strides = [1, 1, 1]} : vector<7x8x128xbf16> to vector<1x8x128xbf16>
    %64 = vector.shape_cast %63 : vector<1x8x128xbf16> to vector<8x128xbf16>
    %65 = vector.extract_strided_slice %58 {offsets = [3, 0, 0], sizes = [1, 8, 128], strides = [1, 1, 1]} : vector<7x8x128xbf16> to vector<1x8x128xbf16>
    %66 = vector.shape_cast %65 : vector<1x8x128xbf16> to vector<8x128xbf16>
    %67 = vector.extract_strided_slice %58 {offsets = [4, 0, 0], sizes = [1, 8, 128], strides = [1, 1, 1]} : vector<7x8x128xbf16> to vector<1x8x128xbf16>
    %68 = vector.shape_cast %67 : vector<1x8x128xbf16> to vector<8x128xbf16>
    %69 = vector.extract_strided_slice %58 {offsets = [5, 0, 0], sizes = [1, 8, 128], strides = [1, 1, 1]} : vector<7x8x128xbf16> to vector<1x8x128xbf16>
    %70 = vector.shape_cast %69 : vector<1x8x128xbf16> to vector<8x128xbf16>
    %71 = vector.extract_strided_slice %58 {offsets = [6, 0, 0], sizes = [1, 8, 128], strides = [1, 1, 1]} : vector<7x8x128xbf16> to vector<1x8x128xbf16>
    %72 = vector.shape_cast %71 : vector<1x8x128xbf16> to vector<8x128xbf16>
    %73 = tpu.concatenate %60, %62, %64, %66, %68, %70, %72 in 1 : vector<8x128xbf16>, vector<8x128xbf16>, vector<8x128xbf16>, vector<8x128xbf16>, vector<8x128xbf16>, vector<8x128xbf16>, vector<8x128xbf16> -> vector<8x896xbf16>
    %c0_35 = arith.constant 0 : index
    %c0_36 = arith.constant 0 : index
    %74 = vector.load %arg8[%c0_35, %c0_36] : memref<896x128xbf16, #tpu.memory_space<vmem>>, vector<896x128xbf16>
    %cst_37 = arith.constant dense<0.000000e+00> : vector<8x128xf32>
    %75 = tpu.matmul %73, %74, %cst_37 {dimension_numbers = #tpu.dot_dimension_numbers<[1], [0], [0], [1], [0, 0, 1, 1], [], []>} : vector<8x896xbf16>, vector<896x128xbf16>, vector<8x128xf32> -> vector<8x128xf32>
    %c0_38 = arith.constant 0 : index
    %c0_39 = arith.constant 0 : index
    %76 = vector.load %arg9[%c0_38, %c0_39] : memref<1x128xf32, #tpu.memory_space<vmem>>, vector<1x128xf32>
    %77 = vector.broadcast %76 : vector<1x128xf32> to vector<8x128xf32>
    %78 = arith.addf %75, %77 : vector<8x128xf32>
    %c0_40 = arith.constant 0 : index
    %c0_41 = arith.constant 0 : index
    %79 = vector.load %arg10[%c0_40, %c0_41] : memref<8x128xf32, #tpu.memory_space<vmem>>, vector<8x128xf32>
    tpu.vector_store %arg10[%c0_40, %c0_41], %78 {strides = array<i32>} : memref<8x128xf32, #tpu.memory_space<vmem>>, vector<8x128xf32>,
    return
  }
  func.func @transform_0(%arg0: i32) -> (i32, i32, i32) {
    %c0_i32 = arith.constant 0 : i32
    %c0_i32_0 = arith.constant 0 : i32
    %c0_i32_1 = arith.constant 0 : i32
    return %c0_i32, %arg0, %c0_i32_0 : i32, i32, i32
  }
  func.func @transform_1(%arg0: i32) -> (i32, i32) {
    %c0_i32 = arith.constant 0 : i32
    %c0_i32_0 = arith.constant 0 : i32
    %c0_i32_1 = arith.constant 0 : i32
    return %c0_i32, %c0_i32_0 : i32, i32
  }
  func.func @transform_2(%arg0: i32) -> (i32, i32) {
    %c0_i32 = arith.constant 0 : i32
    %c0_i32_0 = arith.constant 0 : i32
    %c0_i32_1 = arith.constant 0 : i32
    return %c0_i32, %c0_i32_0 : i32, i32
  }
  func.func @transform_3(%arg0: i32) -> (i32, i32) {
    %c0_i32 = arith.constant 0 : i32
    %c0_i32_0 = arith.constant 0 : i32
    %c0_i32_1 = arith.constant 0 : i32
    return %c0_i32, %c0_i32_0 : i32, i32
  }
  func.func @transform_4(%arg0: i32) -> (i32, i32) {
    %c0_i32 = arith.constant 0 : i32
    %c0_i32_0 = arith.constant 0 : i32
    %c0_i32_1 = arith.constant 0 : i32
    return %c0_i32, %c0_i32_0 : i32, i32
  }
  func.func @transform_5(%arg0: i32) -> (i32, i32) {
    %c0_i32 = arith.constant 0 : i32
    %c0_i32_0 = arith.constant 0 : i32
    %c0_i32_1 = arith.constant 0 : i32
    return %c0_i32, %c0_i32_0 : i32, i32
  }
  func.func @transform_6(%arg0: i32) -> (i32, i32) {
    %c0_i32 = arith.constant 0 : i32
    %c0_i32_0 = arith.constant 0 : i32
    %c0_i32_1 = arith.constant 0 : i32
    return %c0_i32, %c0_i32_0 : i32, i32
  }
  func.func @transform_7(%arg0: i32) -> (i32, i32) {
    %c0_i32 = arith.constant 0 : i32
    %c0_i32_0 = arith.constant 0 : i32
    %c0_i32_1 = arith.constant 0 : i32
    return %c0_i32, %c0_i32_0 : i32, i32
  }
  func.func @transform_8(%arg0: i32) -> (i32, i32) {
    %c0_i32 = arith.constant 0 : i32
    %c0_i32_0 = arith.constant 0 : i32
    %c0_i32_1 = arith.constant 0 : i32
    return %c0_i32, %c0_i32_0 : i32, i32
  }
  func.func @transform_9(%arg0: i32) -> (i32, i32) {
    %c0_i32 = arith.constant 0 : i32
    %c0_i32_0 = arith.constant 0 : i32
    return %arg0, %c0_i32 : i32, i32
  }
}

</mosaic_0001>

<llo_original>
// kernel: tile.13
$region0: #{tile.13}
  #allocation0 [shape = 's32[1]{0}', space=sflag, size = 0x4, scoped, tag = 'scoped memory for tile.13']
  %s0 = inlined_call_operand.vmem [shape: f32[8], index: 0, kind: input, shape index: {}]
  %s1 = inlined_call_operand.vmem [shape: f32[28,8], index: 1, kind: output, shape index: {}]
  // Predicated region
  $region2: #{tile.13} parent=0 // pred_check
    _
  $region3: #{tile.13} parent=0 // pred_check_branch
    %3 = sbr.rel (0) target = $region5
  $region4: #{tile.13} parent=0 // pred_region
    _
  $region5: #{tile.13} parent=0 // pred_fallthru
    _
  %v4 = vld [vmem:[%s0] ss:$0 sm:$0xff]
  %5 = vst [vmem:[%s1] sm:$0xff] %v4
  %s6 = scalar_lea.vmem %s1, 8
  %7 = vst [vmem:[%s6] sm:$0xff] %v4
  %s8 = scalar_lea.vmem %s1, 16
  %9 = vst [vmem:[%s8] sm:$0xff] %v4
  %s10 = scalar_lea.vmem %s1, 24
  %11 = vst [vmem:[%s10] sm:$0xff] %v4

// kernel: tile.14
$region0: #{tile.14}
  %s0 = inlined_call_operand.vmem [shape: f32[28,8], index: 0, kind: input, shape index: {}]
  %s1 = inlined_call_operand.vmem [shape: f32[1,224], index: 1, kind: output, shape index: {}]
  $region1: #{tile.14} parent=0
    #allocation0 [shape = 'u8[8192]{0}', space=vmem, size = 0x2000, scoped, tag = 'scoped mem for output reshape']
    %s2 = smov 3
    %v3 = vld [vmem:[%s0] ss:$16 sm:%s2]
    %vm4 = vcmask 64512
    %5 = vst.msk [vmem:[#allocation0] ss:$8 sm:$0x3] %vm4, %v3
    %s6 = scalar_lea.vmem %s0, 15
    %v7 = vld [vmem:[%s6] sm:$0x1]
    %8 = vrot.lane.b32.xlu0 %v7, 120
    %v9 = vpop.permute.xlu0 %8
    %vm10 = vcmask 1048512
    %11 = vst.msk [vmem:[#allocation0] sm:$0x1] %vm10, %v9
    %s12 = scalar_lea.vmem %s0, 14
    %v13 = vld [vmem:[%s12] sm:$0x1]
    %14 = vrot.lane.b32.xlu0 %v13, 112
    %v15 = vpop.permute.xlu0 %14
    %vm16 = vcmask 982912
    %17 = vst.msk [vmem:[#allocation0] sm:$0x1] %vm16, %v15
    %s18 = scalar_lea.vmem %s0, 13
    %v19 = vld [vmem:[%s18] sm:$0x1]
    %20 = vrot.lane.b32.xlu0 %v19, 104
    %v21 = vpop.permute.xlu0 %20
    %vm22 = vcmask 917312
    %23 = vst.msk [vmem:[#allocation0] sm:$0x1] %vm22, %v21
    %s24 = scalar_lea.vmem %s0, 12
    %v25 = vld [vmem:[%s24] sm:$0x1]
    %26 = vrot.lane.b32.xlu0 %v25, 96
    %v27 = vpop.permute.xlu0 %26
    %vm28 = vcmask 851712
    %29 = vst.msk [vmem:[#allocation0] sm:$0x1] %vm28, %v27
    %s30 = scalar_lea.vmem %s0, 11
    %s31 = smov 3
    %v32 = vld [vmem:[%s30] ss:$16 sm:%s31]
    %33 = vrot.lane.b32.xlu0 %v32, 88
    %v34 = vpop.permute.xlu0 %33
    %vm35 = vcmask 786112
    %36 = vst.msk [vmem:[#allocation0] ss:$8 sm:$0x3] %vm35, %v34
    %s37 = scalar_lea.vmem %s0, 10
    %s38 = smov 3
    %v39 = vld [vmem:[%s37] ss:$16 sm:%s38]
    %40 = vrot.lane.b32.xlu0 %v39, 80
    %v41 = vpop.permute.xlu0 %40
    %vm42 = vcmask 720512
    %43 = vst.msk [vmem:[#allocation0] ss:$8 sm:$0x3] %vm42, %v41
    %s44 = scalar_lea.vmem %s0, 9
    %s45 = smov 3
    %v46 = vld [vmem:[%s44] ss:$16 sm:%s45]
    %47 = vrot.lane.b32.xlu0 %v46, 72
    %v48 = vpop.permute.xlu0 %47
    %vm49 = vcmask 654912
    %50 = vst.msk [vmem:[#allocation0] ss:$8 sm:$0x3] %vm49, %v48
    %s51 = scalar_lea.vmem %s0, 8
    %s52 = smov 3
    %v53 = vld [vmem:[%s51] ss:$16 sm:%s52]
    %54 = vrot.lane.b32.xlu0 %v53, 64
    %v55 = vpop.permute.xlu0 %54
    %vm56 = vcmask 589312
    %57 = vst.msk [vmem:[#allocation0] ss:$8 sm:$0x3] %vm56, %v55
    %s58 = scalar_lea.vmem %s0, 7
    %s59 = smov 3
    %v60 = vld [vmem:[%s58] ss:$16 sm:%s59]
    %61 = vrot.lane.b32.xlu0 %v60, 56
    %v62 = vpop.permute.xlu0 %61
    %vm63 = vcmask 523712
    %64 = vst.msk [vmem:[#allocation0] ss:$8 sm:$0x3] %vm63, %v62
    %s65 = scalar_lea.vmem %s0, 6
    %s66 = smov 3
    %v67 = vld [vmem:[%s65] ss:$16 sm:%s66]
    %68 = vrot.lane.b32.xlu0 %v67, 48
    %v69 = vpop.permute.xlu0 %68
    %vm70 = vcmask 458112
    %71 = vst.msk [vmem:[#allocation0] ss:$8 sm:$0x3] %vm70, %v69
    %s72 = scalar_lea.vmem %s0, 5
    %s73 = smov 3
    %v74 = vld [vmem:[%s72] ss:$16 sm:%s73]
    %75 = vrot.lane.b32.xlu0 %v74, 40
    %v76 = vpop.permute.xlu0 %75
    %vm77 = vcmask 392512
    %78 = vst.msk [vmem:[#allocation0] ss:$8 sm:$0x3] %vm77, %v76
    %s79 = scalar_lea.vmem %s0, 4
    %s80 = smov 3
    %v81 = vld [vmem:[%s79] ss:$16 sm:%s80]
    %82 = vrot.lane.b32.xlu0 %v81, 32
    %v83 = vpop.permute.xlu0 %82
    %vm84 = vcmask 326912
    %85 = vst.msk [vmem:[#allocation0] ss:$8 sm:$0x3] %vm84, %v83
    %s86 = scalar_lea.vmem %s0, 3
    %s87 = smov 3
    %v88 = vld [vmem:[%s86] ss:$16 sm:%s87]
    %89 = vrot.lane.b32.xlu0 %v88, 24
    %v90 = vpop.permute.xlu0 %89
    %vm91 = vcmask 261312
    %92 = vst.msk [vmem:[#allocation0] ss:$8 sm:$0x3] %vm91, %v90
    %s93 = scalar_lea.vmem %s0, 2
    %s94 = smov 3
    %v95 = vld [vmem:[%s93] ss:$16 sm:%s94]
    %96 = vrot.lane.b32.xlu0 %v95, 16
    %v97 = vpop.permute.xlu0 %96
    %vm98 = vcmask 195712
    %99 = vst.msk [vmem:[#allocation0] ss:$8 sm:$0x3] %vm98, %v97
    %s100 = scalar_lea.vmem %s0, 1
    %s101 = smov 3
    %v102 = vld [vmem:[%s100] ss:$16 sm:%s101]
    %103 = vrot.lane.b32.xlu0 %v102, 8
    %v104 = vpop.permute.xlu0 %103
    %vm105 = vcmask 130112
    %106 = vst.msk [vmem:[#allocation0] ss:$8 sm:$0x3] %vm105, %v104
    %s108 = sshllo.u32 0, 1
    %v110 = vld [vmem:[#allocation0] sm:%s108]
    %s111 = sshllo.u32 0, 1
    %112 = vst [vmem:[%s1] sm:%s111] %v110
    %s113 = scalar_lea.vmem [#allocation0], 8
    %v114 = vld [vmem:[%s113] sm:%s108]
    %s115 = sshllo.u32 0, 1
    %s116 = scalar_lea.vmem %s1, 1
    %117 = vst [vmem:[%s116] sm:%s115] %v114

// kernel: tile.18
$region0: #{tile.18}
  #allocation0 [shape = 's32[1]{0}', space=sflag, size = 0x4, scoped, tag = 'scoped memory for tile.18']
  %s0 = inlined_call_operand.vmem [shape: f32[16], index: 0, kind: input, shape index: {}]
  %s1 = inlined_call_operand.vmem [shape: f32[14,16], index: 1, kind: output, shape index: {}]
  // Predicated region
  $region2: #{tile.18} parent=0 // pred_check
    _
  $region3: #{tile.18} parent=0 // pred_check_branch
    %3 = sbr.rel (0) target = $region5
  $region4: #{tile.18} parent=0 // pred_region
    _
  $region5: #{tile.18} parent=0 // pred_fallthru
    _
  %v4 = vld [vmem:[%s0] ss:$0 sm:$0xff]
  %5 = vst [vmem:[%s1] sm:$0xff] %v4
  %s6 = scalar_lea.vmem %s1, 8
  %7 = vst [vmem:[%s6] sm:$0xff] %v4

// kernel: tile.19
$region0: #{tile.19}
  %s0 = inlined_call_operand.vmem [shape: f32[14,16], index: 0, kind: input, shape index: {}]
  %s1 = inlined_call_operand.vmem [shape: f32[1,224], index: 1, kind: output, shape index: {}]
  $region1: #{tile.19} parent=0
    #allocation0 [shape = 'u8[8192]{0}', space=vmem, size = 0x2000, scoped, tag = 'scoped mem for output reshape']
    %s2 = smov 3
    %v3 = vld [vmem:[%s0] ss:$8 sm:%s2]
    %vm4 = vcmask 130048
    %5 = vst.msk [vmem:[#allocation0] ss:$8 sm:$0x3] %vm4, %v3
    %s6 = scalar_lea.vmem %s0, 7
    %v7 = vld [vmem:[%s6] sm:$0x1]
    %8 = vrot.lane.b32.xlu0 %v7, 112
    %v9 = vpop.permute.xlu0 %8
    %vm10 = vcmask 1048448
    %11 = vst.msk [vmem:[#allocation0] sm:$0x1] %vm10, %v9
    %s12 = scalar_lea.vmem %s0, 6
    %v13 = vld [vmem:[%s12] sm:$0x1]
    %14 = vrot.lane.b32.xlu0 %v13, 96
    %v15 = vpop.permute.xlu0 %14
    %vm16 = vcmask 917248
    %17 = vst.msk [vmem:[#allocation0] sm:$0x1] %vm16, %v15
    %s18 = scalar_lea.vmem %s0, 5
    %s19 = smov 3
    %v20 = vld [vmem:[%s18] ss:$8 sm:%s19]
    %21 = vrot.lane.b32.xlu0 %v20, 80
    %v22 = vpop.permute.xlu0 %21
    %vm23 = vcmask 786048
    %24 = vst.msk [vmem:[#allocation0] ss:$8 sm:$0x3] %vm23, %v22
    %s25 = scalar_lea.vmem %s0, 4
    %s26 = smov 3
    %v27 = vld [vmem:[%s25] ss:$8 sm:%s26]
    %28 = vrot.lane.b32.xlu0 %v27, 64
    %v29 = vpop.permute.xlu0 %28
    %vm30 = vcmask 654848
    %31 = vst.msk [vmem:[#allocation0] ss:$8 sm:$0x3] %vm30, %v29
    %s32 = scalar_lea.vmem %s0, 3
    %s33 = smov 3
    %v34 = vld [vmem:[%s32] ss:$8 sm:%s33]
    %35 = vrot.lane.b32.xlu0 %v34, 48
    %v36 = vpop.permute.xlu0 %35
    %vm37 = vcmask 523648
    %38 = vst.msk [vmem:[#allocation0] ss:$8 sm:$0x3] %vm37, %v36
    %s39 = scalar_lea.vmem %s0, 2
    %s40 = smov 3
    %v41 = vld [vmem:[%s39] ss:$8 sm:%s40]
    %42 = vrot.lane.b32.xlu0 %v41, 32
    %v43 = vpop.permute.xlu0 %42
    %vm44 = vcmask 392448
    %45 = vst.msk [vmem:[#allocation0] ss:$8 sm:$0x3] %vm44, %v43
    %s46 = scalar_lea.vmem %s0, 1
    %s47 = smov 3
    %v48 = vld [vmem:[%s46] ss:$8 sm:%s47]
    %49 = vrot.lane.b32.xlu0 %v48, 16
    %v50 = vpop.permute.xlu0 %49
    %vm51 = vcmask 261248
    %52 = vst.msk [vmem:[#allocation0] ss:$8 sm:$0x3] %vm51, %v50
    %s54 = sshllo.u32 0, 1
    %v56 = vld [vmem:[#allocation0] sm:%s54]
    %s57 = sshllo.u32 0, 1
    %58 = vst [vmem:[%s1] sm:%s57] %v56
    %s59 = scalar_lea.vmem [#allocation0], 8
    %v60 = vld [vmem:[%s59] sm:%s54]
    %s61 = sshllo.u32 0, 1
    %s62 = scalar_lea.vmem %s1, 1
    %63 = vst [vmem:[%s62] sm:%s61] %v60

// kernel: cnn_forward.1
$region0: #{cnn_forward.1}
  #allocation0 [shape = 'u32[]', space=smem, size = 0x4, offset = 0x4, fixed_abs, tag = 'smem constant byte address 0x4 - core index']
  #allocation1 [shape = 'u32[144,128]{1,0:T(1,128)}', space=vmem, size = 0x12000, scoped, tag = 'internal scratch']
  #allocation2 [shape = 'bf16[16,8,128]{2,1,0:T(8,128)(2,1)}', space=vmem, size = 0x8000, scoped, tag = 'scratch operand']
  %s0 = inlined_call_operand.vmem [shape: bf16[30,8,30], index: 0, kind: input, shape index: {}]
  %s1 = inlined_call_operand.vmem [shape: bf16[90,224], index: 1, kind: input, shape index: {}]
  %s2 = inlined_call_operand.vmem [shape: f32[1,224], index: 2, kind: input, shape index: {}]
  %s3 = inlined_call_operand.vmem [shape: bf16[224,256], index: 3, kind: input, shape index: {}]
  %s4 = inlined_call_operand.vmem [shape: bf16[384,224], index: 4, kind: input, shape index: {}]
  %s5 = inlined_call_operand.vmem [shape: f32[1,224], index: 5, kind: input, shape index: {}]
  %s6 = inlined_call_operand.vmem [shape: bf16[224,256], index: 6, kind: input, shape index: {}]
  %s7 = inlined_call_operand.vmem [shape: bf16[896,128], index: 7, kind: input, shape index: {}]
  %s8 = inlined_call_operand.vmem [shape: f32[1,128], index: 8, kind: input, shape index: {}]
  %s9 = inlined_call_operand.vmem [shape: f32[8,128], index: 9, kind: output, shape index: {}]
  %s10 = sld [smem:[#allocation0]]
  $region46: #{cnn_forward.1} parent=0
    _
  %s12 = ssub.s32 1, %s10
  %s13 = scalar_select 0, %s12, %s10
  // Predicated region
  $region2: #{cnn_forward.1} parent=0 // pred_check
    _
  $region3: #{cnn_forward.1} parent=0 // pred_check_branch
    %15 = sbr.rel (0) target = $region5
  $region4: #{cnn_forward.1} parent=0 // pred_region
    _
  $region5: #{cnn_forward.1} parent=0 // pred_fallthru
    _
  // Predicated region
  $region6: #{cnn_forward.1} parent=0 // pred_check
    _
  $region7: #{cnn_forward.1} parent=0 // pred_check_branch
    %17 = sbr.rel (0) target = $region9
  $region8: #{cnn_forward.1} parent=0 // pred_region
    _
  $region9: #{cnn_forward.1} parent=0 // pred_fallthru
    _
  // Predicated region
  $region10: #{cnn_forward.1} parent=0 // pred_check
    _
  $region11: #{cnn_forward.1} parent=0 // pred_check_branch
    %19 = sbr.rel (0) target = $region13
  $region12: #{cnn_forward.1} parent=0 // pred_region
    _
  $region13: #{cnn_forward.1} parent=0 // pred_fallthru
    _
  // Predicated region
  $region14: #{cnn_forward.1} parent=0 // pred_check
    _
  $region15: #{cnn_forward.1} parent=0 // pred_check_branch
    %21 = sbr.rel (0) target = $region17
  $region16: #{cnn_forward.1} parent=0 // pred_region
    _
  $region17: #{cnn_forward.1} parent=0 // pred_fallthru
    _
  // Predicated region
  $region18: #{cnn_forward.1} parent=0 // pred_check
    _
  $region19: #{cnn_forward.1} parent=0 // pred_check_branch
    %23 = sbr.rel (0) target = $region21
  $region20: #{cnn_forward.1} parent=0 // pred_region
    _
  $region21: #{cnn_forward.1} parent=0 // pred_fallthru
    _
  // Predicated region
  $region22: #{cnn_forward.1} parent=0 // pred_check
    _
  $region23: #{cnn_forward.1} parent=0 // pred_check_branch
    %25 = sbr.rel (0) target = $region25
  $region24: #{cnn_forward.1} parent=0 // pred_region
    _
  $region25: #{cnn_forward.1} parent=0 // pred_fallthru
    _
  // Predicated region
  $region26: #{cnn_forward.1} parent=0 // pred_check
    _
  $region27: #{cnn_forward.1} parent=0 // pred_check_branch
    %27 = sbr.rel (0) target = $region29
  $region28: #{cnn_forward.1} parent=0 // pred_region
    _
  $region29: #{cnn_forward.1} parent=0 // pred_fallthru
    _
  // Predicated region
  $region30: #{cnn_forward.1} parent=0 // pred_check
    _
  $region31: #{cnn_forward.1} parent=0 // pred_check_branch
    %29 = sbr.rel (0) target = $region33
  $region32: #{cnn_forward.1} parent=0 // pred_region
    _
  $region33: #{cnn_forward.1} parent=0 // pred_fallthru
    _
  // Predicated region
  $region34: #{cnn_forward.1} parent=0 // pred_check
    _
  $region35: #{cnn_forward.1} parent=0 // pred_check_branch
    %31 = sbr.rel (0) target = $region37
  $region36: #{cnn_forward.1} parent=0 // pred_region
    _
  $region37: #{cnn_forward.1} parent=0 // pred_fallthru
    _
  %v33 = vld [vmem:[%s0] sm:$0xf]
  %v34 = vld [vmem:[%s0 + $0x4] sm:$0xf]
  %v35 = vld [vmem:[%s0 + $0x8] sm:$0xf]
  %v36 = vld [vmem:[%s0 + $0xc] sm:$0xf]
  %v37 = vld [vmem:[%s0 + $0x10] sm:$0xf]
  %v38 = vld [vmem:[%s0 + $0x14] sm:$0xf]
  %v39 = vld [vmem:[%s0 + $0x18] sm:$0xf]
  %v40 = vld [vmem:[%s0 + $0x1c] sm:$0xf]
  %v41 = vld [vmem:[%s0 + $0x20] sm:$0xf]
  %v42 = vld [vmem:[%s0 + $0x24] sm:$0xf]
  %v43 = vld [vmem:[%s0 + $0x28] sm:$0xf]
  %v44 = vld [vmem:[%s0 + $0x2c] sm:$0xf]
  %v45 = vld [vmem:[%s0 + $0x30] sm:$0xf]
  %v46 = vld [vmem:[%s0 + $0x34] sm:$0xf]
  %v47 = vld [vmem:[%s0 + $0x38] sm:$0xf]
  %v48 = vld [vmem:[%s0 + $0x3c] sm:$0xf]
  %v49 = vld [vmem:[%s0 + $0x40] sm:$0xf]
  %v50 = vld [vmem:[%s0 + $0x44] sm:$0xf]
  %v51 = vld [vmem:[%s0 + $0x48] sm:$0xf]
  %v52 = vld [vmem:[%s0 + $0x4c] sm:$0xf]
  %v53 = vld [vmem:[%s0 + $0x50] sm:$0xf]
  %v54 = vld [vmem:[%s0 + $0x54] sm:$0xf]
  %v55 = vld [vmem:[%s0 + $0x58] sm:$0xf]
  %v56 = vld [vmem:[%s0 + $0x5c] sm:$0xf]
  %v57 = vld [vmem:[%s0 + $0x60] sm:$0xf]
  %v58 = vld [vmem:[%s0 + $0x64] sm:$0xf]
  %v59 = vld [vmem:[%s0 + $0x68] sm:$0xf]
  %v60 = vld [vmem:[%s0 + $0x6c] sm:$0xf]
  %v61 = vld [vmem:[%s0 + $0x70] sm:$0xf]
  %v62 = vld [vmem:[%s0 + $0x74] sm:$0xf]
  %v91 = vunpack.c.l.b16 %v34
  %v92 = vunpack.c.l.b16 %v35
  %v93 = vunpack.c.l.b16 %v36
  %v94 = vunpack.c.l.b16 %v37
  %v95 = vunpack.c.l.b16 %v38
  %v96 = vunpack.c.l.b16 %v39
  %v97 = vunpack.c.l.b16 %v40
  %v98 = vunpack.c.l.b16 %v41
  %v99 = vunpack.c.l.b16 %v42
  %v100 = vunpack.c.l.b16 %v43
  %v101 = vunpack.c.l.b16 %v44
  %v102 = vunpack.c.l.b16 %v45
  %v103 = vunpack.c.l.b16 %v46
  %v104 = vunpack.c.l.b16 %v47
  %v105 = vunpack.c.l.b16 %v48
  %v106 = vunpack.c.l.b16 %v49
  %v107 = vunpack.c.l.b16 %v50
  %v108 = vunpack.c.l.b16 %v51
  %v109 = vunpack.c.l.b16 %v52
  %v110 = vunpack.c.l.b16 %v53
  %v111 = vunpack.c.l.b16 %v54
  %v112 = vunpack.c.l.b16 %v55
  %v113 = vunpack.c.l.b16 %v56
  %v114 = vunpack.c.l.b16 %v57
  %v115 = vunpack.c.l.b16 %v58
  %v116 = vunpack.c.l.b16 %v59
  %v117 = vunpack.c.l.b16 %v60
  %v118 = vunpack.c.l.b16 %v61
  %v119 = vpack.c.b16 %v91, %v91
  %v120 = vpack.c.b16 %v92, %v92
  %v121 = vpack.c.b16 %v93, %v93
  %v122 = vpack.c.b16 %v94, %v94
  %v123 = vpack.c.b16 %v95, %v95
  %v124 = vpack.c.b16 %v96, %v96
  %v125 = vpack.c.b16 %v97, %v97
  %v126 = vpack.c.b16 %v98, %v98
  %v127 = vpack.c.b16 %v99, %v99
  %v128 = vpack.c.b16 %v100, %v100
  %v129 = vpack.c.b16 %v101, %v101
  %v130 = vpack.c.b16 %v102, %v102
  %v131 = vpack.c.b16 %v103, %v103
  %v132 = vpack.c.b16 %v104, %v104
  %v133 = vpack.c.b16 %v105, %v105
  %v134 = vpack.c.b16 %v106, %v106
  %v135 = vpack.c.b16 %v107, %v107
  %v136 = vpack.c.b16 %v108, %v108
  %v137 = vpack.c.b16 %v109, %v109
  %v138 = vpack.c.b16 %v110, %v110
  %v139 = vpack.c.b16 %v111, %v111
  %v140 = vpack.c.b16 %v112, %v112
  %v141 = vpack.c.b16 %v113, %v113
  %v142 = vpack.c.b16 %v114, %v114
  %v143 = vpack.c.b16 %v115, %v115
  %v144 = vpack.c.b16 %v116, %v116
  %v145 = vpack.c.b16 %v117, %v117
  %v146 = vpack.c.b16 %v118, %v118
  %147 = vrot.lane.b32.xlu0 %v119, 30
  %v148 = vpop.permute.xlu0 %147
  %149 = vrot.lane.b32.xlu0 %v120, 30
  %v150 = vpop.permute.xlu0 %149
  %151 = vrot.lane.b32.xlu0 %v121, 30
  %v152 = vpop.permute.xlu0 %151
  %153 = vrot.lane.b32.xlu0 %v122, 30
  %v154 = vpop.permute.xlu0 %153
  %155 = vrot.lane.b32.xlu0 %v123, 30
  %v156 = vpop.permute.xlu0 %155
  %157 = vrot.lane.b32.xlu0 %v124, 30
  %v158 = vpop.permute.xlu0 %157
  %159 = vrot.lane.b32.xlu0 %v125, 30
  %v160 = vpop.permute.xlu0 %159
  %161 = vrot.lane.b32.xlu0 %v126, 30
  %v162 = vpop.permute.xlu0 %161
  %163 = vrot.lane.b32.xlu0 %v127, 30
  %v164 = vpop.permute.xlu0 %163
  %165 = vrot.lane.b32.xlu0 %v128, 30
  %v166 = vpop.permute.xlu0 %165
  %167 = vrot.lane.b32.xlu0 %v129, 30
  %v168 = vpop.permute.xlu0 %167
  %169 = vrot.lane.b32.xlu0 %v130, 30
  %v170 = vpop.permute.xlu0 %169
  %171 = vrot.lane.b32.xlu0 %v131, 30
  %v172 = vpop.permute.xlu0 %171
  %173 = vrot.lane.b32.xlu0 %v132, 30
  %v174 = vpop.permute.xlu0 %173
  %175 = vrot.lane.b32.xlu0 %v133, 30
  %v176 = vpop.permute.xlu0 %175
  %177 = vrot.lane.b32.xlu0 %v134, 30
  %v178 = vpop.permute.xlu0 %177
  %179 = vrot.lane.b32.xlu0 %v135, 30
  %v180 = vpop.permute.xlu0 %179
  %181 = vrot.lane.b32.xlu0 %v136, 30
  %v182 = vpop.permute.xlu0 %181
  %183 = vrot.lane.b32.xlu0 %v137, 30
  %v184 = vpop.permute.xlu0 %183
  %185 = vrot.lane.b32.xlu0 %v138, 30
  %v186 = vpop.permute.xlu0 %185
  %187 = vrot.lane.b32.xlu0 %v139, 30
  %v188 = vpop.permute.xlu0 %187
  %189 = vrot.lane.b32.xlu0 %v140, 30
  %v190 = vpop.permute.xlu0 %189
  %191 = vrot.lane.b32.xlu0 %v141, 30
  %v192 = vpop.permute.xlu0 %191
  %193 = vrot.lane.b32.xlu0 %v142, 30
  %v194 = vpop.permute.xlu0 %193
  %195 = vrot.lane.b32.xlu0 %v143, 30
  %v196 = vpop.permute.xlu0 %195
  %197 = vrot.lane.b32.xlu0 %v144, 30
  %v198 = vpop.permute.xlu0 %197
  %199 = vrot.lane.b32.xlu0 %v145, 30
  %v200 = vpop.permute.xlu0 %199
  %201 = vrot.lane.b32.xlu0 %v146, 30
  %v202 = vpop.permute.xlu0 %201
  %v204 = vunpack.c.l.b16 %v62
  %v205 = vpack.c.b16 %v204, %v204
  %206 = vrot.lane.b32.xlu0 %v120, 60
  %v207 = vpop.permute.xlu0 %206
  %208 = vrot.lane.b32.xlu0 %v121, 60
  %v209 = vpop.permute.xlu0 %208
  %210 = vrot.lane.b32.xlu0 %v122, 60
  %v211 = vpop.permute.xlu0 %210
  %212 = vrot.lane.b32.xlu0 %v123, 60
  %v213 = vpop.permute.xlu0 %212
  %214 = vrot.lane.b32.xlu0 %v124, 60
  %v215 = vpop.permute.xlu0 %214
  %216 = vrot.lane.b32.xlu0 %v125, 60
  %v217 = vpop.permute.xlu0 %216
  %218 = vrot.lane.b32.xlu0 %v126, 60
  %v219 = vpop.permute.xlu0 %218
  %220 = vrot.lane.b32.xlu0 %v127, 60
  %v221 = vpop.permute.xlu0 %220
  %222 = vrot.lane.b32.xlu0 %v128, 60
  %v223 = vpop.permute.xlu0 %222
  %224 = vrot.lane.b32.xlu0 %v129, 60
  %v225 = vpop.permute.xlu0 %224
  %226 = vrot.lane.b32.xlu0 %v130, 60
  %v227 = vpop.permute.xlu0 %226
  %228 = vrot.lane.b32.xlu0 %v131, 60
  %v229 = vpop.permute.xlu0 %228
  %230 = vrot.lane.b32.xlu0 %v132, 60
  %v231 = vpop.permute.xlu0 %230
  %232 = vrot.lane.b32.xlu0 %v133, 60
  %v233 = vpop.permute.xlu0 %232
  %234 = vrot.lane.b32.xlu0 %v134, 60
  %v235 = vpop.permute.xlu0 %234
  %236 = vrot.lane.b32.xlu0 %v135, 60
  %v237 = vpop.permute.xlu0 %236
  %238 = vrot.lane.b32.xlu0 %v136, 60
  %v239 = vpop.permute.xlu0 %238
  %240 = vrot.lane.b32.xlu0 %v137, 60
  %v241 = vpop.permute.xlu0 %240
  %242 = vrot.lane.b32.xlu0 %v138, 60
  %v243 = vpop.permute.xlu0 %242
  %244 = vrot.lane.b32.xlu0 %v139, 60
  %v245 = vpop.permute.xlu0 %244
  %246 = vrot.lane.b32.xlu0 %v140, 60
  %v247 = vpop.permute.xlu0 %246
  %248 = vrot.lane.b32.xlu0 %v141, 60
  %v249 = vpop.permute.xlu0 %248
  %250 = vrot.lane.b32.xlu0 %v142, 60
  %v251 = vpop.permute.xlu0 %250
  %252 = vrot.lane.b32.xlu0 %v143, 60
  %v253 = vpop.permute.xlu0 %252
  %254 = vrot.lane.b32.xlu0 %v144, 60
  %v255 = vpop.permute.xlu0 %254
  %256 = vrot.lane.b32.xlu0 %v145, 60
  %v257 = vpop.permute.xlu0 %256
  %258 = vrot.lane.b32.xlu0 %v146, 60
  %v259 = vpop.permute.xlu0 %258
  %260 = vrot.lane.b32.xlu0 %v205, 60
  %v261 = vpop.permute.xlu0 %260
  %vm262 = vcmask 244736
  %v265 = vsel %vm262, %v33, %v148
  %v268 = vsel %vm262, %v34, %v150
  %v271 = vsel %vm262, %v35, %v152
  %v274 = vsel %vm262, %v36, %v154
  %v277 = vsel %vm262, %v37, %v156
  %v280 = vsel %vm262, %v38, %v158
  %v283 = vsel %vm262, %v39, %v160
  %v286 = vsel %vm262, %v40, %v162
  %v289 = vsel %vm262, %v41, %v164
  %v292 = vsel %vm262, %v42, %v166
  %v295 = vsel %vm262, %v43, %v168
  %v298 = vsel %vm262, %v44, %v170
  %v301 = vsel %vm262, %v45, %v172
  %v304 = vsel %vm262, %v46, %v174
  %v307 = vsel %vm262, %v47, %v176
  %v310 = vsel %vm262, %v48, %v178
  %v313 = vsel %vm262, %v49, %v180
  %v316 = vsel %vm262, %v50, %v182
  %v319 = vsel %vm262, %v51, %v184
  %v322 = vsel %vm262, %v52, %v186
  %v325 = vsel %vm262, %v53, %v188
  %v328 = vsel %vm262, %v54, %v190
  %v331 = vsel %vm262, %v55, %v192
  %v334 = vsel %vm262, %v56, %v194
  %v337 = vsel %vm262, %v57, %v196
  %v340 = vsel %vm262, %v58, %v198
  %v343 = vsel %vm262, %v59, %v200
  %v346 = vsel %vm262, %v60, %v202
  %vm347 = vcmask 490496
  %v349 = vsel %vm347, %v265, %v207
  %v351 = vsel %vm347, %v268, %v209
  %v353 = vsel %vm347, %v271, %v211
  %v355 = vsel %vm347, %v274, %v213
  %v357 = vsel %vm347, %v277, %v215
  %v359 = vsel %vm347, %v280, %v217
  %v361 = vsel %vm347, %v283, %v219
  %v363 = vsel %vm347, %v286, %v221
  %v365 = vsel %vm347, %v289, %v223
  %v367 = vsel %vm347, %v292, %v225
  %v369 = vsel %vm347, %v295, %v227
  %v371 = vsel %vm347, %v298, %v229
  %v373 = vsel %vm347, %v301, %v231
  %v375 = vsel %vm347, %v304, %v233
  %v377 = vsel %vm347, %v307, %v235
  %v379 = vsel %vm347, %v310, %v237
  %v381 = vsel %vm347, %v313, %v239
  %v383 = vsel %vm347, %v316, %v241
  %v385 = vsel %vm347, %v319, %v243
  %v387 = vsel %vm347, %v322, %v245
  %v389 = vsel %vm347, %v325, %v247
  %v391 = vsel %vm347, %v328, %v249
  %v393 = vsel %vm347, %v331, %v251
  %v395 = vsel %vm347, %v334, %v253
  %v397 = vsel %vm347, %v337, %v255
  %v399 = vsel %vm347, %v340, %v257
  %v401 = vsel %vm347, %v343, %v259
  %v403 = vsel %vm347, %v346, %v261
  %v404 = vld [vmem:[%s1] sm:$0xff]
  %v405 = vld [vmem:[%s1 + $0x8] sm:$0xff]
  %v406 = vld [vmem:[%s1 + $0x10] sm:$0xff]
  %v407 = vld [vmem:[%s1 + $0x18] sm:$0xff]
  %v408 = vld [vmem:[%s1 + $0x20] sm:$0xff]
  %v409 = vld [vmem:[%s1 + $0x28] sm:$0xff]
  %v410 = vld [vmem:[%s1 + $0x30] sm:$0xff]
  %v411 = vld [vmem:[%s1 + $0x38] sm:$0xff]
  %v412 = vld [vmem:[%s1 + $0x40] sm:$0xff]
  %v413 = vld [vmem:[%s1 + $0x48] sm:$0xff]
  %v414 = vld [vmem:[%s1 + $0x50] sm:$0xff]
  %v415 = vld [vmem:[%s1 + $0x58] sm:$0x11]
  %v416 = vld [vmem:[%s2] sm:$0x3]
  %v418 = vlaneseq
  %v419 = vshrl.u32 %v418, 7
  %v420 = vsub.s32 0, %v419
  %v421 = vrot.slane %v416, %v420
  %v422 = vlaneseq
  %v423 = vshrl.u32 %v422, 7
  %v424 = vsub.s32 1, %v423
  %v425 = vrot.slane %v416, %v424
  %v456 = vunpack.c.l.b16 %v349
  %v457 = vunpack.c.l.b16 %v351
  %v458 = vunpack.c.l.b16 %v353
  %v459 = vunpack.c.l.b16 %v355
  %v460 = vunpack.c.l.b16 %v357
  %v461 = vunpack.c.l.b16 %v359
  %v462 = vunpack.c.l.b16 %v361
  %v463 = vunpack.c.l.b16 %v363
  %v464 = vunpack.c.l.b16 %v365
  %v465 = vunpack.c.l.b16 %v367
  %v466 = vunpack.c.l.b16 %v369
  %v467 = vunpack.c.l.b16 %v371
  %v468 = vunpack.c.l.b16 %v373
  %v469 = vunpack.c.l.b16 %v375
  %v470 = vunpack.c.l.b16 %v377
  %v471 = vunpack.c.l.b16 %v379
  %v472 = vunpack.c.l.b16 %v381
  %v473 = vunpack.c.l.b16 %v383
  %v474 = vunpack.c.l.b16 %v385
  %v475 = vunpack.c.l.b16 %v387
  %v476 = vunpack.c.l.b16 %v389
  %v477 = vunpack.c.l.b16 %v391
  %v478 = vunpack.c.l.b16 %v393
  %v479 = vunpack.c.l.b16 %v395
  %v480 = vunpack.c.l.b16 %v397
  %v481 = vunpack.c.l.b16 %v399
  %v482 = vunpack.c.l.b16 %v401
  %v483 = vunpack.c.l.b16 %v403
  %v484 = vpack.c.b16 %v457, %v456
  %v485 = vpack.c.b16 %v459, %v458
  %v486 = vpack.c.b16 %v461, %v460
  %v487 = vpack.c.b16 %v463, %v462
  %v488 = vpack.c.b16 %v465, %v464
  %v489 = vpack.c.b16 %v467, %v466
  %v490 = vpack.c.b16 %v469, %v468
  %v491 = vpack.c.b16 %v471, %v470
  %v492 = vpack.c.b16 %v473, %v472
  %v493 = vpack.c.b16 %v475, %v474
  %v494 = vpack.c.b16 %v477, %v476
  %v495 = vpack.c.b16 %v479, %v478
  %v496 = vpack.c.b16 %v481, %v480
  %v497 = vpack.c.b16 %v483, %v482
  %v510 = vunpack.c.l.b16 %v404
  %v511 = vunpack.c.h.b16 %v404
  %v512 = vunpack.c.l.b16 %v405
  %v513 = vunpack.c.h.b16 %v405
  %v514 = vunpack.c.l.b16 %v406
  %v515 = vunpack.c.h.b16 %v406
  %v516 = vunpack.c.l.b16 %v407
  %v517 = vunpack.c.h.b16 %v407
  %v518 = vunpack.c.l.b16 %v408
  %v519 = vunpack.c.h.b16 %v408
  %v520 = vunpack.c.l.b16 %v409
  %v521 = vunpack.c.h.b16 %v409
  %v522 = vunpack.c.l.b16 %v410
  %v523 = vunpack.c.h.b16 %v410
  %v524 = vunpack.c.l.b16 %v411
  %v525 = vunpack.c.h.b16 %v411
  %v526 = vunpack.c.l.b16 %v412
  %v527 = vunpack.c.h.b16 %v412
  %v528 = vunpack.c.l.b16 %v413
  %v529 = vunpack.c.h.b16 %v413
  %v530 = vunpack.c.l.b16 %v414
  %v531 = vunpack.c.h.b16 %v414
  %v532 = vunpack.c.l.b16 %v415
  %v533 = vunpack.c.h.b16 %v415
  %v534 = vpack.c.b16 %v512, %v510
  %v535 = vpack.c.b16 %v513, %v511
  %v536 = vpack.c.b16 %v516, %v514
  %v537 = vpack.c.b16 %v517, %v515
  %v538 = vpack.c.b16 %v520, %v518
  %v539 = vpack.c.b16 %v521, %v519
  %v540 = vpack.c.b16 %v524, %v522
  %v541 = vpack.c.b16 %v525, %v523
  %v542 = vpack.c.b16 %v528, %v526
  %v543 = vpack.c.b16 %v529, %v527
  %v544 = vpack.c.b16 %v532, %v530
  %v545 = vpack.c.b16 %v533, %v531
  %vm556 = vcmask 736256
  %v558 = vsel %vm556, %v484, 0
  %v561 = vsel %vm556, %v485, 0
  %v564 = vsel %vm556, %v486, 0
  %v567 = vsel %vm556, %v487, 0
  %v570 = vsel %vm556, %v488, 0
  %v573 = vsel %vm556, %v489, 0
  %v576 = vsel %vm556, %v490, 0
  %v579 = vsel %vm556, %v491, 0
  %v582 = vsel %vm556, %v492, 0
  %v585 = vsel %vm556, %v493, 0
  %v588 = vsel %vm556, %v494, 0
  %v591 = vsel %vm556, %v495, 0
  %v594 = vsel %vm556, %v496, 0
  %v597 = vsel %vm556, %v497, 0
  %vm599 = vcmask 1044480
  %v601 = vsel %vm599, %v544, 0
  %v604 = vsel %vm599, %v545, 0
  %606 = vmatprep.subr.bf16.mxu0 %v535
  %607 = vmatpush1.bf16.msra.mxu0 %v534
  %608 = vmatprep.subr.bf16.mxu0 %v537
  %609 = vmatpush1.bf16.msra.mxu0 %v536
  %610 = vmatprep.subr.bf16.mxu0 %v539
  %611 = vmatpush1.bf16.msra.mxu0 %v538
  %612 = vmatprep.subr.bf16.mxu0 %v541
  %613 = vmatpush1.bf16.msra.mxu0 %v540
  %614 = vmatprep.subr.bf16.mxu0 %v543
  %615 = vmatpush1.bf16.msra.mxu0 %v542
  %616 = vmatprep.subr.bf16.mxu0 %v604
  %617 = vmatpush1.bf16.msra.mxu0 %v601
  %618 = vmatprep.subr.bf16.mxu0 0
  %619 = vmatpush1.bf16.msra.mxu0 0
  %620 = vmatprep.subr.bf16.mxu0 0
  %621 = vmatpush1.bf16.msra.mxu0 0
  %622 = vmatprep.subr.bf16.mxu0 0
  %623 = vmatpush1.bf16.msra.mxu0 0
  %624 = vmatprep.subr.bf16.mxu0 0
  %625 = vmatpush1.bf16.msra.mxu0 0
  %626 = vmatprep.subr.bf16.mxu0 0
  %627 = vmatpush1.bf16.msra.mxu0 0
  %628 = vmatprep.subr.bf16.mxu0 0
  %629 = vmatpush1.bf16.msra.mxu0 0
  %630 = vmatprep.subr.bf16.mxu0 0
  %631 = vmatpush1.bf16.msra.mxu0 0
  %632 = vmatprep.subr.bf16.mxu0 0
  %633 = vmatpush1.bf16.msra.mxu0 0
  %634 = vmatprep.subr.bf16.mxu0 0
  %635 = vmatpush1.bf16.msra.mxu0 0
  %636 = vmatprep.subr.bf16.mxu0 0
  %637 = vmatpush1.bf16.msra.mxu0 0
  %638 = vmatprep.mubr.bf16.mxu0 0
  %639 = vmatmul.mubr.bf16.gmra.mrb[0].mxu0 %v558
  %v640 = vpop.f32.mrb[0].mxu0
  %v641 = vadd.f32 %v421, %v640
  %v642 = vpop.f32.mrb[0].mxu0
  %v643 = vadd.f32 %v425, %v642
  %v644 = vpop.f32.mrb[0].mxu0
  %v645 = vadd.f32 %v421, %v644
  %v646 = vpop.f32.mrb[0].mxu0
  %v647 = vadd.f32 %v425, %v646
  %648 = vmatprep.mubr.bf16.mxu0 0
  %649 = vmatmul.mubr.bf16.gmra.mrb[0].mxu0 %v561
  %v650 = vpop.f32.mrb[0].mxu0
  %v651 = vadd.f32 %v421, %v650
  %v652 = vpop.f32.mrb[0].mxu0
  %v653 = vadd.f32 %v425, %v652
  %v654 = vpop.f32.mrb[0].mxu0
  %v655 = vadd.f32 %v421, %v654
  %v656 = vpop.f32.mrb[0].mxu0
  %v657 = vadd.f32 %v425, %v656
  %658 = vmatprep.mubr.bf16.mxu0 0
  %659 = vmatmul.mubr.bf16.gmra.mrb[0].mxu0 %v564
  %v660 = vpop.f32.mrb[0].mxu0
  %v661 = vadd.f32 %v421, %v660
  %v662 = vpop.f32.mrb[0].mxu0
  %v663 = vadd.f32 %v425, %v662
  %v664 = vpop.f32.mrb[0].mxu0
  %v665 = vadd.f32 %v421, %v664
  %v666 = vpop.f32.mrb[0].mxu0
  %v667 = vadd.f32 %v425, %v666
  %668 = vmatprep.mubr.bf16.mxu0 0
  %669 = vmatmul.mubr.bf16.gmra.mrb[0].mxu0 %v567
  %v670 = vpop.f32.mrb[0].mxu0
  %v671 = vadd.f32 %v421, %v670
  %v672 = vpop.f32.mrb[0].mxu0
  %v673 = vadd.f32 %v425, %v672
  %v674 = vpop.f32.mrb[0].mxu0
  %v675 = vadd.f32 %v421, %v674
  %v676 = vpop.f32.mrb[0].mxu0
  %v677 = vadd.f32 %v425, %v676
  %678 = vmatprep.mubr.bf16.mxu0 0
  %679 = vmatmul.mubr.bf16.gmra.mrb[0].mxu0 %v570
  %v680 = vpop.f32.mrb[0].mxu0
  %v681 = vadd.f32 %v421, %v680
  %v682 = vpop.f32.mrb[0].mxu0
  %v683 = vadd.f32 %v425, %v682
  %v684 = vpop.f32.mrb[0].mxu0
  %v685 = vadd.f32 %v421, %v684
  %v686 = vpop.f32.mrb[0].mxu0
  %v687 = vadd.f32 %v425, %v686
  %688 = vmatprep.mubr.bf16.mxu0 0
  %689 = vmatmul.mubr.bf16.gmra.mrb[0].mxu0 %v573
  %v690 = vpop.f32.mrb[0].mxu0
  %v691 = vadd.f32 %v421, %v690
  %v692 = vpop.f32.mrb[0].mxu0
  %v693 = vadd.f32 %v425, %v692
  %v694 = vpop.f32.mrb[0].mxu0
  %v695 = vadd.f32 %v421, %v694
  %v696 = vpop.f32.mrb[0].mxu0
  %v697 = vadd.f32 %v425, %v696
  %698 = vmatprep.mubr.bf16.mxu0 0
  %699 = vmatmul.mubr.bf16.gmra.mrb[0].mxu0 %v576
  %v700 = vpop.f32.mrb[0].mxu0
  %v701 = vadd.f32 %v421, %v700
  %v702 = vpop.f32.mrb[0].mxu0
  %v703 = vadd.f32 %v425, %v702
  %v704 = vpop.f32.mrb[0].mxu0
  %v705 = vadd.f32 %v421, %v704
  %v706 = vpop.f32.mrb[0].mxu0
  %v707 = vadd.f32 %v425, %v706
  %708 = vmatprep.mubr.bf16.mxu0 0
  %709 = vmatmul.mubr.bf16.gmra.mrb[0].mxu0 %v579
  %v710 = vpop.f32.mrb[0].mxu0
  %v711 = vadd.f32 %v421, %v710
  %v712 = vpop.f32.mrb[0].mxu0
  %v713 = vadd.f32 %v425, %v712
  %v714 = vpop.f32.mrb[0].mxu0
  %v715 = vadd.f32 %v421, %v714
  %v716 = vpop.f32.mrb[0].mxu0
  %v717 = vadd.f32 %v425, %v716
  %718 = vmatprep.mubr.bf16.mxu0 0
  %719 = vmatmul.mubr.bf16.gmra.mrb[0].mxu0 %v582
  %v720 = vpop.f32.mrb[0].mxu0
  %v721 = vadd.f32 %v421, %v720
  %v722 = vpop.f32.mrb[0].mxu0
  %v723 = vadd.f32 %v425, %v722
  %v724 = vpop.f32.mrb[0].mxu0
  %v725 = vadd.f32 %v421, %v724
  %v726 = vpop.f32.mrb[0].mxu0
  %v727 = vadd.f32 %v425, %v726
  %728 = vmatprep.mubr.bf16.mxu0 0
  %729 = vmatmul.mubr.bf16.gmra.mrb[0].mxu0 %v585
  %v730 = vpop.f32.mrb[0].mxu0
  %v731 = vadd.f32 %v421, %v730
  %v732 = vpop.f32.mrb[0].mxu0
  %v733 = vadd.f32 %v425, %v732
  %v734 = vpop.f32.mrb[0].mxu0
  %v735 = vadd.f32 %v421, %v734
  %v736 = vpop.f32.mrb[0].mxu0
  %v737 = vadd.f32 %v425, %v736
  %738 = vmatprep.mubr.bf16.mxu0 0
  %739 = vmatmul.mubr.bf16.gmra.mrb[0].mxu0 %v588
  %v740 = vpop.f32.mrb[0].mxu0
  %v741 = vadd.f32 %v421, %v740
  %v742 = vpop.f32.mrb[0].mxu0
  %v743 = vadd.f32 %v425, %v742
  %v744 = vpop.f32.mrb[0].mxu0
  %v745 = vadd.f32 %v421, %v744
  %v746 = vpop.f32.mrb[0].mxu0
  %v747 = vadd.f32 %v425, %v746
  %748 = vmatprep.mubr.bf16.mxu0 0
  %749 = vmatmul.mubr.bf16.gmra.mrb[0].mxu0 %v591
  %v750 = vpop.f32.mrb[0].mxu0
  %v751 = vadd.f32 %v421, %v750
  %v752 = vpop.f32.mrb[0].mxu0
  %v753 = vadd.f32 %v425, %v752
  %v754 = vpop.f32.mrb[0].mxu0
  %v755 = vadd.f32 %v421, %v754
  %v756 = vpop.f32.mrb[0].mxu0
  %v757 = vadd.f32 %v425, %v756
  %758 = vmatprep.mubr.bf16.mxu0 0
  %759 = vmatmul.mubr.bf16.gmra.mrb[0].mxu0 %v594
  %v760 = vpop.f32.mrb[0].mxu0
  %v761 = vadd.f32 %v421, %v760
  %v762 = vpop.f32.mrb[0].mxu0
  %v763 = vadd.f32 %v425, %v762
  %v764 = vpop.f32.mrb[0].mxu0
  %v765 = vadd.f32 %v421, %v764
  %v766 = vpop.f32.mrb[0].mxu0
  %v767 = vadd.f32 %v425, %v766
  %768 = vmatprep.mubr.bf16.mxu0 0
  %769 = vmatmul.mubr.bf16.gmra.mrb[0].mxu0 %v597
  %v770 = vpop.f32.mrb[0].mxu0
  %v771 = vadd.f32 %v421, %v770
  %v772 = vpop.f32.mrb[0].mxu0
  %v773 = vadd.f32 %v425, %v772
  %v774 = vpop.f32.mrb[0].mxu0
  %v775 = vadd.f32 %v421, %v774
  %v776 = vpop.f32.mrb[0].mxu0
  %v777 = vadd.f32 %v425, %v776
  %778 = vdwg.mxu0
  %v779 = vmax.f32 %v641, 0.0
  %v780 = vmax.f32 %v643, 0.0
  %v781 = vmax.f32 %v645, 0.0
  %v782 = vmax.f32 %v647, 0.0
  %v783 = vmax.f32 %v651, 0.0
  %v784 = vmax.f32 %v653, 0.0
  %v785 = vmax.f32 %v655, 0.0
  %v786 = vmax.f32 %v657, 0.0
  %v787 = vmax.f32 %v661, 0.0
  %v788 = vmax.f32 %v663, 0.0
  %v789 = vmax.f32 %v665, 0.0
  %v790 = vmax.f32 %v667, 0.0
  %v791 = vmax.f32 %v671, 0.0
  %v792 = vmax.f32 %v673, 0.0
  %v793 = vmax.f32 %v675, 0.0
  %v794 = vmax.f32 %v677, 0.0
  %v795 = vmax.f32 %v681, 0.0
  %v796 = vmax.f32 %v683, 0.0
  %v797 = vmax.f32 %v685, 0.0
  %v798 = vmax.f32 %v687, 0.0
  %v799 = vmax.f32 %v691, 0.0
  %v800 = vmax.f32 %v693, 0.0
  %v801 = vmax.f32 %v695, 0.0
  %v802 = vmax.f32 %v697, 0.0
  %v803 = vmax.f32 %v701, 0.0
  %v804 = vmax.f32 %v703, 0.0
  %v805 = vmax.f32 %v705, 0.0
  %v806 = vmax.f32 %v707, 0.0
  %v807 = vmax.f32 %v711, 0.0
  %v808 = vmax.f32 %v713, 0.0
  %v809 = vmax.f32 %v715, 0.0
  %v810 = vmax.f32 %v717, 0.0
  %v811 = vmax.f32 %v721, 0.0
  %v812 = vmax.f32 %v723, 0.0
  %v813 = vmax.f32 %v725, 0.0
  %v814 = vmax.f32 %v727, 0.0
  %v815 = vmax.f32 %v731, 0.0
  %v816 = vmax.f32 %v733, 0.0
  %v817 = vmax.f32 %v735, 0.0
  %v818 = vmax.f32 %v737, 0.0
  %v819 = vmax.f32 %v741, 0.0
  %v820 = vmax.f32 %v743, 0.0
  %v821 = vmax.f32 %v745, 0.0
  %v822 = vmax.f32 %v747, 0.0
  %v823 = vmax.f32 %v751, 0.0
  %v824 = vmax.f32 %v753, 0.0
  %v825 = vmax.f32 %v755, 0.0
  %v826 = vmax.f32 %v757, 0.0
  %v827 = vmax.f32 %v761, 0.0
  %v828 = vmax.f32 %v763, 0.0
  %v829 = vmax.f32 %v765, 0.0
  %v830 = vmax.f32 %v767, 0.0
  %v831 = vmax.f32 %v771, 0.0
  %v832 = vmax.f32 %v773, 0.0
  %v833 = vmax.f32 %v775, 0.0
  %v834 = vmax.f32 %v777, 0.0
  %v835 = vmax.f32 %v779, %v781
  %v836 = vmax.f32 %v780, %v782
  %v837 = vmax.f32 %v783, %v785
  %v838 = vmax.f32 %v784, %v786
  %v839 = vmax.f32 %v787, %v789
  %v840 = vmax.f32 %v788, %v790
  %v841 = vmax.f32 %v791, %v793
  %v842 = vmax.f32 %v792, %v794
  %v843 = vmax.f32 %v795, %v797
  %v844 = vmax.f32 %v796, %v798
  %v845 = vmax.f32 %v799, %v801
  %v846 = vmax.f32 %v800, %v802
  %v847 = vmax.f32 %v803, %v805
  %v848 = vmax.f32 %v804, %v806
  %v849 = vmax.f32 %v807, %v809
  %v850 = vmax.f32 %v808, %v810
  %v851 = vmax.f32 %v811, %v813
  %v852 = vmax.f32 %v812, %v814
  %v853 = vmax.f32 %v815, %v817
  %v854 = vmax.f32 %v816, %v818
  %v855 = vmax.f32 %v819, %v821
  %v856 = vmax.f32 %v820, %v822
  %v857 = vmax.f32 %v823, %v825
  %v858 = vmax.f32 %v824, %v826
  %v859 = vmax.f32 %v827, %v829
  %v860 = vmax.f32 %v828, %v830
  %v861 = vmax.f32 %v831, %v833
  %v862 = vmax.f32 %v832, %v834
  %v863 = vpack.c.bf16 %v837, %v835
  %v864 = vpack.c.bf16 %v838, %v836
  %v865 = vpack.c.bf16 %v841, %v839
  %v866 = vpack.c.bf16 %v842, %v840
  %v867 = vpack.c.bf16 %v845, %v843
  %v868 = vpack.c.bf16 %v846, %v844
  %v869 = vpack.c.bf16 %v849, %v847
  %v870 = vpack.c.bf16 %v850, %v848
  %v871 = vpack.c.bf16 %v853, %v851
  %v872 = vpack.c.bf16 %v854, %v852
  %v873 = vpack.c.bf16 %v857, %v855
  %v874 = vpack.c.bf16 %v858, %v856
  %v875 = vpack.c.bf16 %v861, %v859
  %v876 = vpack.c.bf16 %v862, %v860
  %v877 = vld [vmem:[%s3] sm:$0xff]
  %v878 = vld [vmem:[%s3 + $0x8] sm:$0xff]
  %v879 = vld [vmem:[%s3 + $0x10] sm:$0xff]
  %v880 = vld [vmem:[%s3 + $0x18] sm:$0xff]
  %v881 = vld [vmem:[%s3 + $0x20] sm:$0xff]
  %v882 = vld [vmem:[%s3 + $0x28] sm:$0xff]
  %v883 = vld [vmem:[%s3 + $0x30] sm:$0xff]
  %v884 = vld [vmem:[%s3 + $0x38] sm:$0xff]
  %v885 = vld [vmem:[%s3 + $0x40] sm:$0xff]
  %v886 = vld [vmem:[%s3 + $0x48] sm:$0xff]
  %v887 = vld [vmem:[%s3 + $0x50] sm:$0xff]
  %v888 = vld [vmem:[%s3 + $0x58] sm:$0xff]
  %v889 = vld [vmem:[%s3 + $0x60] sm:$0xff]
  %v890 = vld [vmem:[%s3 + $0x68] sm:$0xff]
  %v891 = vld [vmem:[%s3 + $0x70] sm:$0xff]
  %v892 = vld [vmem:[%s3 + $0x78] sm:$0xff]
  %v893 = vld [vmem:[%s3 + $0x80] sm:$0xff]
  %v894 = vld [vmem:[%s3 + $0x88] sm:$0xff]
  %v895 = vld [vmem:[%s3 + $0x90] sm:$0xff]
  %v896 = vld [vmem:[%s3 + $0x98] sm:$0xff]
  %v897 = vld [vmem:[%s3 + $0xa0] sm:$0xff]
  %v898 = vld [vmem:[%s3 + $0xa8] sm:$0xff]
  %v899 = vld [vmem:[%s3 + $0xb0] sm:$0xff]
  %v900 = vld [vmem:[%s3 + $0xb8] sm:$0xff]
  %v901 = vld [vmem:[%s3 + $0xc0] sm:$0xff]
  %v902 = vld [vmem:[%s3 + $0xc8] sm:$0xff]
  %v903 = vld [vmem:[%s3 + $0xd0] sm:$0xff]
  %v904 = vld [vmem:[%s3 + $0xd8] sm:$0xff]
  %v933 = vunpack.c.l.b16 %v877
  %v934 = vunpack.c.h.b16 %v877
  %v935 = vunpack.c.l.b16 %v878
  %v936 = vunpack.c.h.b16 %v878
  %v937 = vunpack.c.l.b16 %v879
  %v938 = vunpack.c.h.b16 %v879
  %v939 = vunpack.c.l.b16 %v880
  %v940 = vunpack.c.h.b16 %v880
  %v941 = vunpack.c.l.b16 %v881
  %v942 = vunpack.c.h.b16 %v881
  %v943 = vunpack.c.l.b16 %v882
  %v944 = vunpack.c.h.b16 %v882
  %v945 = vunpack.c.l.b16 %v883
  %v946 = vunpack.c.h.b16 %v883
  %v947 = vunpack.c.l.b16 %v884
  %v948 = vunpack.c.h.b16 %v884
  %v949 = vunpack.c.l.b16 %v885
  %v950 = vunpack.c.h.b16 %v885
  %v951 = vunpack.c.l.b16 %v886
  %v952 = vunpack.c.h.b16 %v886
  %v953 = vunpack.c.l.b16 %v887
  %v954 = vunpack.c.h.b16 %v887
  %v955 = vunpack.c.l.b16 %v888
  %v956 = vunpack.c.h.b16 %v888
  %v957 = vunpack.c.l.b16 %v889
  %v958 = vunpack.c.h.b16 %v889
  %v959 = vunpack.c.l.b16 %v890
  %v960 = vunpack.c.h.b16 %v890
  %v961 = vunpack.c.l.b16 %v891
  %v962 = vunpack.c.h.b16 %v891
  %v963 = vunpack.c.l.b16 %v892
  %v964 = vunpack.c.h.b16 %v892
  %v965 = vunpack.c.l.b16 %v893
  %v966 = vunpack.c.h.b16 %v893
  %v967 = vunpack.c.l.b16 %v894
  %v968 = vunpack.c.h.b16 %v894
  %v969 = vunpack.c.l.b16 %v895
  %v970 = vunpack.c.h.b16 %v895
  %v971 = vunpack.c.l.b16 %v896
  %v972 = vunpack.c.h.b16 %v896
  %v973 = vunpack.c.l.b16 %v897
  %v974 = vunpack.c.h.b16 %v897
  %v975 = vunpack.c.l.b16 %v898
  %v976 = vunpack.c.h.b16 %v898
  %v977 = vunpack.c.l.b16 %v899
  %v978 = vunpack.c.h.b16 %v899
  %v979 = vunpack.c.l.b16 %v900
  %v980 = vunpack.c.h.b16 %v900
  %v981 = vunpack.c.l.b16 %v901
  %v982 = vunpack.c.h.b16 %v901
  %v983 = vunpack.c.l.b16 %v902
  %v984 = vunpack.c.h.b16 %v902
  %v985 = vunpack.c.l.b16 %v903
  %v986 = vunpack.c.h.b16 %v903
  %v987 = vunpack.c.l.b16 %v904
  %v988 = vunpack.c.h.b16 %v904
  %v989 = vpack.c.b16 %v935, %v933
  %v990 = vpack.c.b16 %v936, %v934
  %v991 = vpack.c.b16 %v939, %v937
  %v992 = vpack.c.b16 %v940, %v938
  %v993 = vpack.c.b16 %v943, %v941
  %v994 = vpack.c.b16 %v944, %v942
  %v995 = vpack.c.b16 %v947, %v945
  %v996 = vpack.c.b16 %v948, %v946
  %v997 = vpack.c.b16 %v951, %v949
  %v998 = vpack.c.b16 %v952, %v950
  %v999 = vpack.c.b16 %v955, %v953
  %v1000 = vpack.c.b16 %v956, %v954
  %v1001 = vpack.c.b16 %v959, %v957
  %v1002 = vpack.c.b16 %v960, %v958
  %v1003 = vpack.c.b16 %v963, %v961
  %v1004 = vpack.c.b16 %v964, %v962
  %v1005 = vpack.c.b16 %v967, %v965
  %v1006 = vpack.c.b16 %v968, %v966
  %v1007 = vpack.c.b16 %v971, %v969
  %v1008 = vpack.c.b16 %v972, %v970
  %v1009 = vpack.c.b16 %v975, %v973
  %v1010 = vpack.c.b16 %v976, %v974
  %v1011 = vpack.c.b16 %v979, %v977
  %v1012 = vpack.c.b16 %v980, %v978
  %v1013 = vpack.c.b16 %v983, %v981
  %v1014 = vpack.c.b16 %v984, %v982
  %v1015 = vpack.c.b16 %v987, %v985
  %v1016 = vpack.c.b16 %v988, %v986
  %vm1045 = vcmask 785408
  %v1047 = vsel %vm1045, %v864, 0
  %v1050 = vsel %vm1045, %v866, 0
  %v1053 = vsel %vm1045, %v868, 0
  %v1056 = vsel %vm1045, %v870, 0
  %v1059 = vsel %vm1045, %v872, 0
  %v1062 = vsel %vm1045, %v874, 0
  %v1065 = vsel %vm1045, %v876, 0
  %1067 = vmatprep.subr.bf16.mxu0 %v990
  %1068 = vmatpush1.bf16.msra.mxu0 %v989
  %1069 = vmatprep.subr.bf16.mxu0 %v992
  %1070 = vmatpush1.bf16.msra.mxu0 %v991
  %1071 = vmatprep.subr.bf16.mxu0 %v994
  %1072 = vmatpush1.bf16.msra.mxu0 %v993
  %1073 = vmatprep.subr.bf16.mxu0 %v996
  %1074 = vmatpush1.bf16.msra.mxu0 %v995
  %1075 = vmatprep.subr.bf16.mxu0 %v998
  %1076 = vmatpush1.bf16.msra.mxu0 %v997
  %1077 = vmatprep.subr.bf16.mxu0 %v1000
  %1078 = vmatpush1.bf16.msra.mxu0 %v999
  %1079 = vmatprep.subr.bf16.mxu0 %v1002
  %1080 = vmatpush1.bf16.msra.mxu0 %v1001
  %1081 = vmatprep.subr.bf16.mxu0 %v1004
  %1082 = vmatpush1.bf16.msra.mxu0 %v1003
  %1083 = vmatprep.subr.bf16.mxu0 %v1006
  %1084 = vmatpush1.bf16.msra.mxu0 %v1005
  %1085 = vmatprep.subr.bf16.mxu0 %v1008
  %1086 = vmatpush1.bf16.msra.mxu0 %v1007
  %1087 = vmatprep.subr.bf16.mxu0 %v1010
  %1088 = vmatpush1.bf16.msra.mxu0 %v1009
  %1089 = vmatprep.subr.bf16.mxu0 %v1012
  %1090 = vmatpush1.bf16.msra.mxu0 %v1011
  %1091 = vmatprep.subr.bf16.mxu0 %v1014
  %1092 = vmatpush1.bf16.msra.mxu0 %v1013
  %1093 = vmatprep.subr.bf16.mxu0 %v1016
  %1094 = vmatpush1.bf16.msra.mxu0 %v1015
  %1095 = vmatprep.subr.bf16.mxu0 0
  %1096 = vmatpush1.bf16.msra.mxu0 0
  %1097 = vmatprep.subr.bf16.mxu0 0
  %1098 = vmatpush1.bf16.msra.mxu0 0
  %1099 = vmatprep.mubr.bf16.mxu0 %v1047
  %1100 = vmatmul.mubr.bf16.gmra.mrb[0].mxu0 %v863
  %v1101 = vpop.f32.mrb[0].mxu0
  %v1102 = vadd.f32 0.0, %v1101
  %v1103 = vpop.f32.mrb[0].mxu0
  %v1104 = vadd.f32 0.0, %v1103
  %v1105 = vpop.f32.mrb[0].mxu0
  %v1106 = vadd.f32 0.0, %v1105
  %v1107 = vpop.f32.mrb[0].mxu0
  %v1108 = vadd.f32 0.0, %v1107
  %1109 = vmatprep.mubr.bf16.mxu0 %v1050
  %1110 = vmatmul.mubr.bf16.gmra.mrb[0].mxu0 %v865
  %v1111 = vpop.f32.mrb[0].mxu0
  %v1112 = vadd.f32 0.0, %v1111
  %v1113 = vpop.f32.mrb[0].mxu0
  %v1114 = vadd.f32 0.0, %v1113
  %v1115 = vpop.f32.mrb[0].mxu0
  %v1116 = vadd.f32 0.0, %v1115
  %v1117 = vpop.f32.mrb[0].mxu0
  %v1118 = vadd.f32 0.0, %v1117
  %1119 = vmatprep.mubr.bf16.mxu0 %v1053
  %1120 = vmatmul.mubr.bf16.gmra.mrb[0].mxu0 %v867
  %v1121 = vpop.f32.mrb[0].mxu0
  %v1122 = vadd.f32 0.0, %v1121
  %v1123 = vpop.f32.mrb[0].mxu0
  %v1124 = vadd.f32 0.0, %v1123
  %v1125 = vpop.f32.mrb[0].mxu0
  %v1126 = vadd.f32 0.0, %v1125
  %v1127 = vpop.f32.mrb[0].mxu0
  %v1128 = vadd.f32 0.0, %v1127
  %1129 = vmatprep.mubr.bf16.mxu0 %v1056
  %1130 = vmatmul.mubr.bf16.gmra.mrb[0].mxu0 %v869
  %v1131 = vpop.f32.mrb[0].mxu0
  %v1132 = vadd.f32 0.0, %v1131
  %v1133 = vpop.f32.mrb[0].mxu0
  %v1134 = vadd.f32 0.0, %v1133
  %v1135 = vpop.f32.mrb[0].mxu0
  %v1136 = vadd.f32 0.0, %v1135
  %v1137 = vpop.f32.mrb[0].mxu0
  %v1138 = vadd.f32 0.0, %v1137
  %1139 = vmatprep.mubr.bf16.mxu0 %v1059
  %1140 = vmatmul.mubr.bf16.gmra.mrb[0].mxu0 %v871
  %v1141 = vpop.f32.mrb[0].mxu0
  %v1142 = vadd.f32 0.0, %v1141
  %v1143 = vpop.f32.mrb[0].mxu0
  %v1144 = vadd.f32 0.0, %v1143
  %v1145 = vpop.f32.mrb[0].mxu0
  %v1146 = vadd.f32 0.0, %v1145
  %v1147 = vpop.f32.mrb[0].mxu0
  %v1148 = vadd.f32 0.0, %v1147
  %1149 = vmatprep.mubr.bf16.mxu0 %v1062
  %1150 = vmatmul.mubr.bf16.gmra.mrb[0].mxu0 %v873
  %v1151 = vpop.f32.mrb[0].mxu0
  %v1152 = vadd.f32 0.0, %v1151
  %v1153 = vpop.f32.mrb[0].mxu0
  %v1154 = vadd.f32 0.0, %v1153
  %v1155 = vpop.f32.mrb[0].mxu0
  %v1156 = vadd.f32 0.0, %v1155
  %v1157 = vpop.f32.mrb[0].mxu0
  %v1158 = vadd.f32 0.0, %v1157
  %1159 = vmatprep.mubr.bf16.mxu0 %v1065
  %1160 = vmatmul.mubr.bf16.gmra.mrb[0].mxu0 %v875
  %v1161 = vpop.f32.mrb[0].mxu0
  %v1162 = vadd.f32 0.0, %v1161
  %v1163 = vpop.f32.mrb[0].mxu0
  %v1164 = vadd.f32 0.0, %v1163
  %v1165 = vpop.f32.mrb[0].mxu0
  %v1166 = vadd.f32 0.0, %v1165
  %v1167 = vpop.f32.mrb[0].mxu0
  %v1168 = vadd.f32 0.0, %v1167
  %1169 = vdwg.mxu0
  %v1170 = vmax.f32 %v1102, %v1104
  %v1171 = vmax.f32 %v1106, %v1108
  %v1172 = vmax.f32 %v1112, %v1114
  %v1173 = vmax.f32 %v1116, %v1118
  %v1174 = vmax.f32 %v1122, %v1124
  %v1175 = vmax.f32 %v1126, %v1128
  %v1176 = vmax.f32 %v1132, %v1134
  %v1177 = vmax.f32 %v1136, %v1138
  %v1178 = vmax.f32 %v1142, %v1144
  %v1179 = vmax.f32 %v1146, %v1148
  %v1180 = vmax.f32 %v1152, %v1154
  %v1181 = vmax.f32 %v1156, %v1158
  %v1182 = vmax.f32 %v1162, %v1164
  %v1183 = vmax.f32 %v1166, %v1168
  %1184 = vst [vmem:[#allocation2] sm:$0xf] 0
  %s1185 = scalar_lea.vmem [#allocation2], 60
  %1186 = vst [vmem:[%s1185] sm:$0xf] 0
  %v1187 = vpack.c.bf16 %v1170, %v1170
  %v1188 = vpack.c.bf16 %v1171, %v1171
  %v1189 = vpack.c.bf16 %v1172, %v1172
  %v1190 = vpack.c.bf16 %v1173, %v1173
  %v1191 = vpack.c.bf16 %v1174, %v1174
  %v1192 = vpack.c.bf16 %v1175, %v1175
  %v1193 = vpack.c.bf16 %v1176, %v1176
  %v1194 = vpack.c.bf16 %v1177, %v1177
  %v1195 = vpack.c.bf16 %v1178, %v1178
  %v1196 = vpack.c.bf16 %v1179, %v1179
  %v1197 = vpack.c.bf16 %v1180, %v1180
  %v1198 = vpack.c.bf16 %v1181, %v1181
  %v1199 = vpack.c.bf16 %v1182, %v1182
  %v1200 = vpack.c.bf16 %v1183, %v1183
  %s1201 = scalar_lea.vmem [#allocation2], 4
  %1202 = vst [vmem:[%s1201] sm:$0xf] %v1187
  %1203 = vst [vmem:[%s1201 + $0x4] sm:$0xf] %v1188
  %1204 = vst [vmem:[%s1201 + $0x8] sm:$0xf] %v1189
  %1205 = vst [vmem:[%s1201 + $0xc] sm:$0xf] %v1190
  %1206 = vst [vmem:[%s1201 + $0x10] sm:$0xf] %v1191
  %1207 = vst [vmem:[%s1201 + $0x14] sm:$0xf] %v1192
  %1208 = vst [vmem:[%s1201 + $0x18] sm:$0xf] %v1193
  %1209 = vst [vmem:[%s1201 + $0x1c] sm:$0xf] %v1194
  %1210 = vst [vmem:[%s1201 + $0x20] sm:$0xf] %v1195
  %1211 = vst [vmem:[%s1201 + $0x24] sm:$0xf] %v1196
  %1212 = vst [vmem:[%s1201 + $0x28] sm:$0xf] %v1197
  %1213 = vst [vmem:[%s1201 + $0x2c] sm:$0xf] %v1198
  %1214 = vst [vmem:[%s1201 + $0x30] sm:$0xf] %v1199
  %1215 = vst [vmem:[%s1201 + $0x34] sm:$0xf] %v1200
  %v1216 = vld [vmem:[#allocation2] sm:$0xf]
  %v1217 = vld [vmem:[#allocation2 + $0x4] sm:$0xf]
  %v1218 = vld [vmem:[#allocation2 + $0x8] sm:$0xf]
  %v1219 = vld [vmem:[#allocation2 + $0xc] sm:$0xf]
  %v1220 = vld [vmem:[#allocation2 + $0x10] sm:$0xf]
  %v1221 = vld [vmem:[#allocation2 + $0x14] sm:$0xf]
  %v1222 = vld [vmem:[#allocation2 + $0x18] sm:$0xf]
  %v1223 = vld [vmem:[#allocation2 + $0x1c] sm:$0xf]
  %v1224 = vld [vmem:[#allocation2 + $0x20] sm:$0xf]
  %v1225 = vld [vmem:[#allocation2 + $0x24] sm:$0xf]
  %v1226 = vld [vmem:[#allocation2 + $0x28] sm:$0xf]
  %v1227 = vld [vmem:[#allocation2 + $0x2c] sm:$0xf]
  %v1228 = vld [vmem:[#allocation2 + $0x30] sm:$0xf]
  %v1229 = vld [vmem:[#allocation2 + $0x34] sm:$0xf]
  %v1230 = vld [vmem:[%s1201] sm:$0xf]
  %v1231 = vld [vmem:[%s1201 + $0x4] sm:$0xf]
  %v1232 = vld [vmem:[%s1201 + $0x8] sm:$0xf]
  %v1233 = vld [vmem:[%s1201 + $0xc] sm:$0xf]
  %v1234 = vld [vmem:[%s1201 + $0x10] sm:$0xf]
  %v1235 = vld [vmem:[%s1201 + $0x14] sm:$0xf]
  %v1236 = vld [vmem:[%s1201 + $0x18] sm:$0xf]
  %v1237 = vld [vmem:[%s1201 + $0x1c] sm:$0xf]
  %v1238 = vld [vmem:[%s1201 + $0x20] sm:$0xf]
  %v1239 = vld [vmem:[%s1201 + $0x24] sm:$0xf]
  %v1240 = vld [vmem:[%s1201 + $0x28] sm:$0xf]
  %v1241 = vld [vmem:[%s1201 + $0x2c] sm:$0xf]
  %v1242 = vld [vmem:[%s1201 + $0x30] sm:$0xf]
  %v1243 = vld [vmem:[%s1201 + $0x34] sm:$0xf]
  %s1244 = scalar_lea.vmem [#allocation2], 8
  %v1245 = vld [vmem:[%s1244] sm:$0xf]
  %v1246 = vld [vmem:[%s1244 + $0x4] sm:$0xf]
  %v1247 = vld [vmem:[%s1244 + $0x8] sm:$0xf]
  %v1248 = vld [vmem:[%s1244 + $0xc] sm:$0xf]
  %v1249 = vld [vmem:[%s1244 + $0x10] sm:$0xf]
  %v1250 = vld [vmem:[%s1244 + $0x14] sm:$0xf]
  %v1251 = vld [vmem:[%s1244 + $0x18] sm:$0xf]
  %v1252 = vld [vmem:[%s1244 + $0x1c] sm:$0xf]
  %v1253 = vld [vmem:[%s1244 + $0x20] sm:$0xf]
  %v1254 = vld [vmem:[%s1244 + $0x24] sm:$0xf]
  %v1255 = vld [vmem:[%s1244 + $0x28] sm:$0xf]
  %v1256 = vld [vmem:[%s1244 + $0x2c] sm:$0xf]
  %v1257 = vld [vmem:[%s1244 + $0x30] sm:$0xf]
  %v1258 = vld [vmem:[%s1244 + $0x34] sm:$0xf]
  %v1301 = vunpack.c.l.b16 %v1216
  %v1302 = vunpack.c.l.b16 %v1230
  %v1303 = vunpack.c.l.b16 %v1245
  %v1304 = vunpack.c.l.b16 %v1217
  %v1305 = vunpack.c.l.b16 %v1231
  %v1306 = vunpack.c.l.b16 %v1246
  %v1307 = vunpack.c.l.b16 %v1218
  %v1308 = vunpack.c.l.b16 %v1232
  %v1309 = vunpack.c.l.b16 %v1247
  %v1310 = vunpack.c.l.b16 %v1219
  %v1311 = vunpack.c.l.b16 %v1233
  %v1312 = vunpack.c.l.b16 %v1248
  %v1313 = vunpack.c.l.b16 %v1220
  %v1314 = vunpack.c.l.b16 %v1234
  %v1315 = vunpack.c.l.b16 %v1249
  %v1316 = vunpack.c.l.b16 %v1221
  %v1317 = vunpack.c.l.b16 %v1235
  %v1318 = vunpack.c.l.b16 %v1250
  %v1319 = vunpack.c.l.b16 %v1222
  %v1320 = vunpack.c.l.b16 %v1236
  %v1321 = vunpack.c.l.b16 %v1251
  %v1322 = vunpack.c.l.b16 %v1223
  %v1323 = vunpack.c.l.b16 %v1237
  %v1324 = vunpack.c.l.b16 %v1252
  %v1325 = vunpack.c.l.b16 %v1224
  %v1326 = vunpack.c.l.b16 %v1238
  %v1327 = vunpack.c.l.b16 %v1253
  %v1328 = vunpack.c.l.b16 %v1225
  %v1329 = vunpack.c.l.b16 %v1239
  %v1330 = vunpack.c.l.b16 %v1254
  %v1331 = vunpack.c.l.b16 %v1226
  %v1332 = vunpack.c.l.b16 %v1240
  %v1333 = vunpack.c.l.b16 %v1255
  %v1334 = vunpack.c.l.b16 %v1227
  %v1335 = vunpack.c.l.b16 %v1241
  %v1336 = vunpack.c.l.b16 %v1256
  %v1337 = vunpack.c.l.b16 %v1228
  %v1338 = vunpack.c.l.b16 %v1242
  %v1339 = vunpack.c.l.b16 %v1257
  %v1340 = vunpack.c.l.b16 %v1229
  %v1341 = vunpack.c.l.b16 %v1243
  %v1342 = vunpack.c.l.b16 %v1258
  %v1343 = vld [vmem:[%s4] sm:$0xff]
  %v1344 = vld [vmem:[%s4 + $0x8] sm:$0xff]
  %v1345 = vld [vmem:[%s4 + $0x10] sm:$0xff]
  %v1346 = vld [vmem:[%s4 + $0x18] sm:$0xff]
  %v1347 = vld [vmem:[%s4 + $0x20] sm:$0xff]
  %v1348 = vld [vmem:[%s4 + $0x28] sm:$0xff]
  %v1349 = vld [vmem:[%s4 + $0x30] sm:$0xff]
  %v1350 = vld [vmem:[%s4 + $0x38] sm:$0xff]
  %v1351 = vld [vmem:[%s4 + $0x40] sm:$0xff]
  %v1352 = vld [vmem:[%s4 + $0x48] sm:$0xff]
  %v1353 = vld [vmem:[%s4 + $0x50] sm:$0xff]
  %v1354 = vld [vmem:[%s4 + $0x58] sm:$0xff]
  %v1355 = vld [vmem:[%s4 + $0x60] sm:$0xff]
  %v1356 = vld [vmem:[%s4 + $0x68] sm:$0xff]
  %v1357 = vld [vmem:[%s4 + $0x70] sm:$0xff]
  %v1358 = vld [vmem:[%s4 + $0x78] sm:$0xff]
  %v1359 = vld [vmem:[%s4 + $0x80] sm:$0xff]
  %v1360 = vld [vmem:[%s4 + $0x88] sm:$0xff]
  %v1361 = vld [vmem:[%s4 + $0x90] sm:$0xff]
  %v1362 = vld [vmem:[%s4 + $0x98] sm:$0xff]
  %v1363 = vld [vmem:[%s4 + $0xa0] sm:$0xff]
  %v1364 = vld [vmem:[%s4 + $0xa8] sm:$0xff]
  %v1365 = vld [vmem:[%s4 + $0xb0] sm:$0xff]
  %v1366 = vld [vmem:[%s4 + $0xb8] sm:$0xff]
  %v1367 = vld [vmem:[%s4 + $0xc0] sm:$0xff]
  %v1368 = vld [vmem:[%s4 + $0xc8] sm:$0xff]
  %v1369 = vld [vmem:[%s4 + $0xd0] sm:$0xff]
  %v1370 = vld [vmem:[%s4 + $0xd8] sm:$0xff]
  %v1371 = vld [vmem:[%s4 + $0xe0] sm:$0xff]
  %v1372 = vld [vmem:[%s4 + $0xe8] sm:$0xff]
  %v1373 = vld [vmem:[%s4 + $0xf0] sm:$0xff]
  %v1374 = vld [vmem:[%s4 + $0xf8] sm:$0xff]
  %v1375 = vld [vmem:[%s4 + $0x100] sm:$0xff]
  %v1376 = vld [vmem:[%s4 + $0x108] sm:$0xff]
  %v1377 = vld [vmem:[%s4 + $0x110] sm:$0xff]
  %v1378 = vld [vmem:[%s4 + $0x118] sm:$0xff]
  %v1379 = vld [vmem:[%s4 + $0x120] sm:$0xff]
  %v1380 = vld [vmem:[%s4 + $0x128] sm:$0xff]
  %v1381 = vld [vmem:[%s4 + $0x130] sm:$0xff]
  %v1382 = vld [vmem:[%s4 + $0x138] sm:$0xff]
  %v1383 = vld [vmem:[%s4 + $0x140] sm:$0xff]
  %v1384 = vld [vmem:[%s4 + $0x148] sm:$0xff]
  %v1385 = vld [vmem:[%s4 + $0x150] sm:$0xff]
  %v1386 = vld [vmem:[%s4 + $0x158] sm:$0xff]
  %v1387 = vld [vmem:[%s4 + $0x160] sm:$0xff]
  %v1388 = vld [vmem:[%s4 + $0x168] sm:$0xff]
  %v1389 = vld [vmem:[%s4 + $0x170] sm:$0xff]
  %v1390 = vld [vmem:[%s4 + $0x178] sm:$0xff]
  %v1391 = vld [vmem:[%s5] sm:$0x3]
  %v1393 = vlaneseq
  %v1394 = vshrl.u32 %v1393, 7
  %v1395 = vsub.s32 0, %v1394
  %v1396 = vrot.slane %v1391, %v1395
  %v1397 = vlaneseq
  %v1398 = vshrl.u32 %v1397, 7
  %v1399 = vsub.s32 1, %v1398
  %v1400 = vrot.slane %v1391, %v1399
  %v1403 = vpack.c.b16 %v1304, %v1301
  %v1404 = vpack.c.b16 %v1305, %v1302
  %v1405 = vpack.c.b16 %v1306, %v1303
  %v1406 = vpack.c.b16 %v1310, %v1307
  %v1407 = vpack.c.b16 %v1311, %v1308
  %v1408 = vpack.c.b16 %v1312, %v1309
  %v1409 = vpack.c.b16 %v1316, %v1313
  %v1410 = vpack.c.b16 %v1317, %v1314
  %v1411 = vpack.c.b16 %v1318, %v1315
  %v1412 = vpack.c.b16 %v1322, %v1319
  %v1413 = vpack.c.b16 %v1323, %v1320
  %v1414 = vpack.c.b16 %v1324, %v1321
  %v1415 = vpack.c.b16 %v1328, %v1325
  %v1416 = vpack.c.b16 %v1329, %v1326
  %v1417 = vpack.c.b16 %v1330, %v1327
  %v1418 = vpack.c.b16 %v1334, %v1331
  %v1419 = vpack.c.b16 %v1335, %v1332
  %v1420 = vpack.c.b16 %v1336, %v1333
  %v1421 = vpack.c.b16 %v1340, %v1337
  %v1422 = vpack.c.b16 %v1341, %v1338
  %v1423 = vpack.c.b16 %v1342, %v1339
  %v1493 = vunpack.c.l.b16 %v1343
  %v1494 = vunpack.c.h.b16 %v1343
  %v1495 = vunpack.c.l.b16 %v1344
  %v1496 = vunpack.c.h.b16 %v1344
  %v1497 = vunpack.c.l.b16 %v1345
  %v1498 = vunpack.c.h.b16 %v1345
  %v1499 = vunpack.c.l.b16 %v1346
  %v1500 = vunpack.c.h.b16 %v1346
  %v1501 = vunpack.c.l.b16 %v1347
  %v1502 = vunpack.c.h.b16 %v1347
  %v1503 = vunpack.c.l.b16 %v1348
  %v1504 = vunpack.c.h.b16 %v1348
  %v1505 = vunpack.c.l.b16 %v1349
  %v1506 = vunpack.c.h.b16 %v1349
  %v1507 = vunpack.c.l.b16 %v1350
  %v1508 = vunpack.c.h.b16 %v1350
  %v1509 = vunpack.c.l.b16 %v1351
  %v1510 = vunpack.c.h.b16 %v1351
  %v1511 = vunpack.c.l.b16 %v1352
  %v1512 = vunpack.c.h.b16 %v1352
  %v1513 = vunpack.c.l.b16 %v1353
  %v1514 = vunpack.c.h.b16 %v1353
  %v1515 = vunpack.c.l.b16 %v1354
  %v1516 = vunpack.c.h.b16 %v1354
  %v1517 = vunpack.c.l.b16 %v1355
  %v1518 = vunpack.c.h.b16 %v1355
  %v1519 = vunpack.c.l.b16 %v1356
  %v1520 = vunpack.c.h.b16 %v1356
  %v1521 = vunpack.c.l.b16 %v1357
  %v1522 = vunpack.c.h.b16 %v1357
  %v1523 = vunpack.c.l.b16 %v1358
  %v1524 = vunpack.c.h.b16 %v1358
  %v1525 = vunpack.c.l.b16 %v1359
  %v1526 = vunpack.c.h.b16 %v1359
  %v1527 = vunpack.c.l.b16 %v1360
  %v1528 = vunpack.c.h.b16 %v1360
  %v1529 = vunpack.c.l.b16 %v1361
  %v1530 = vunpack.c.h.b16 %v1361
  %v1531 = vunpack.c.l.b16 %v1362
  %v1532 = vunpack.c.h.b16 %v1362
  %v1533 = vunpack.c.l.b16 %v1363
  %v1534 = vunpack.c.h.b16 %v1363
  %v1535 = vunpack.c.l.b16 %v1364
  %v1536 = vunpack.c.h.b16 %v1364
  %v1537 = vunpack.c.l.b16 %v1365
  %v1538 = vunpack.c.h.b16 %v1365
  %v1539 = vunpack.c.l.b16 %v1366
  %v1540 = vunpack.c.h.b16 %v1366
  %v1541 = vunpack.c.l.b16 %v1367
  %v1542 = vunpack.c.h.b16 %v1367
  %v1543 = vunpack.c.l.b16 %v1368
  %v1544 = vunpack.c.h.b16 %v1368
  %v1545 = vunpack.c.l.b16 %v1369
  %v1546 = vunpack.c.h.b16 %v1369
  %v1547 = vunpack.c.l.b16 %v1370
  %v1548 = vunpack.c.h.b16 %v1370
  %v1549 = vunpack.c.l.b16 %v1371
  %v1550 = vunpack.c.h.b16 %v1371
  %v1551 = vunpack.c.l.b16 %v1372
  %v1552 = vunpack.c.h.b16 %v1372
  %v1553 = vunpack.c.l.b16 %v1373
  %v1554 = vunpack.c.h.b16 %v1373
  %v1555 = vunpack.c.l.b16 %v1374
  %v1556 = vunpack.c.h.b16 %v1374
  %v1557 = vunpack.c.l.b16 %v1375
  %v1558 = vunpack.c.h.b16 %v1375
  %v1559 = vunpack.c.l.b16 %v1376
  %v1560 = vunpack.c.h.b16 %v1376
  %v1561 = vunpack.c.l.b16 %v1377
  %v1562 = vunpack.c.h.b16 %v1377
  %v1563 = vunpack.c.l.b16 %v1378
  %v1564 = vunpack.c.h.b16 %v1378
  %v1565 = vunpack.c.l.b16 %v1379
  %v1566 = vunpack.c.h.b16 %v1379
  %v1567 = vunpack.c.l.b16 %v1380
  %v1568 = vunpack.c.h.b16 %v1380
  %v1569 = vunpack.c.l.b16 %v1381
  %v1570 = vunpack.c.h.b16 %v1381
  %v1571 = vunpack.c.l.b16 %v1382
  %v1572 = vunpack.c.h.b16 %v1382
  %v1573 = vunpack.c.l.b16 %v1383
  %v1574 = vunpack.c.h.b16 %v1383
  %v1575 = vunpack.c.l.b16 %v1384
  %v1576 = vunpack.c.h.b16 %v1384
  %v1577 = vunpack.c.l.b16 %v1385
  %v1578 = vunpack.c.h.b16 %v1385
  %v1579 = vunpack.c.l.b16 %v1386
  %v1580 = vunpack.c.h.b16 %v1386
  %v1581 = vunpack.c.l.b16 %v1387
  %v1582 = vunpack.c.h.b16 %v1387
  %v1583 = vunpack.c.l.b16 %v1388
  %v1584 = vunpack.c.h.b16 %v1388
  %v1585 = vunpack.c.l.b16 %v1389
  %v1586 = vunpack.c.h.b16 %v1389
  %v1587 = vunpack.c.l.b16 %v1390
  %v1588 = vunpack.c.h.b16 %v1390
  %v1589 = vpack.c.b16 %v1495, %v1493
  %v1590 = vpack.c.b16 %v1496, %v1494
  %v1591 = vpack.c.b16 %v1499, %v1497
  %v1592 = vpack.c.b16 %v1500, %v1498
  %v1593 = vpack.c.b16 %v1503, %v1501
  %v1594 = vpack.c.b16 %v1504, %v1502
  %v1595 = vpack.c.b16 %v1507, %v1505
  %v1596 = vpack.c.b16 %v1508, %v1506
  %v1597 = vpack.c.b16 %v1511, %v1509
  %v1598 = vpack.c.b16 %v1512, %v1510
  %v1599 = vpack.c.b16 %v1515, %v1513
  %v1600 = vpack.c.b16 %v1516, %v1514
  %v1601 = vpack.c.b16 %v1519, %v1517
  %v1602 = vpack.c.b16 %v1520, %v1518
  %v1603 = vpack.c.b16 %v1523, %v1521
  %v1604 = vpack.c.b16 %v1524, %v1522
  %v1605 = vpack.c.b16 %v1527, %v1525
  %v1606 = vpack.c.b16 %v1528, %v1526
  %v1607 = vpack.c.b16 %v1531, %v1529
  %v1608 = vpack.c.b16 %v1532, %v1530
  %v1609 = vpack.c.b16 %v1535, %v1533
  %v1610 = vpack.c.b16 %v1536, %v1534
  %v1611 = vpack.c.b16 %v1539, %v1537
  %v1612 = vpack.c.b16 %v1540, %v1538
  %v1613 = vpack.c.b16 %v1543, %v1541
  %v1614 = vpack.c.b16 %v1544, %v1542
  %v1615 = vpack.c.b16 %v1547, %v1545
  %v1616 = vpack.c.b16 %v1548, %v1546
  %v1617 = vpack.c.b16 %v1551, %v1549
  %v1618 = vpack.c.b16 %v1552, %v1550
  %v1619 = vpack.c.b16 %v1555, %v1553
  %v1620 = vpack.c.b16 %v1556, %v1554
  %v1621 = vpack.c.b16 %v1559, %v1557
  %v1622 = vpack.c.b16 %v1560, %v1558
  %v1623 = vpack.c.b16 %v1563, %v1561
  %v1624 = vpack.c.b16 %v1564, %v1562
  %v1625 = vpack.c.b16 %v1567, %v1565
  %v1626 = vpack.c.b16 %v1568, %v1566
  %v1627 = vpack.c.b16 %v1571, %v1569
  %v1628 = vpack.c.b16 %v1572, %v1570
  %v1629 = vpack.c.b16 %v1575, %v1573
  %v1630 = vpack.c.b16 %v1576, %v1574
  %v1631 = vpack.c.b16 %v1579, %v1577
  %v1632 = vpack.c.b16 %v1580, %v1578
  %v1633 = vpack.c.b16 %v1583, %v1581
  %v1634 = vpack.c.b16 %v1584, %v1582
  %v1635 = vpack.c.b16 %v1587, %v1585
  %v1636 = vpack.c.b16 %v1588, %v1586
  %1685 = vmatprep.subr.bf16.mxu0 %v1590
  %1686 = vmatpush1.bf16.msra.mxu0 %v1589
  %1687 = vmatprep.subr.bf16.mxu0 %v1592
  %1688 = vmatpush1.bf16.msra.mxu0 %v1591
  %1689 = vmatprep.subr.bf16.mxu0 %v1594
  %1690 = vmatpush1.bf16.msra.mxu0 %v1593
  %1691 = vmatprep.subr.bf16.mxu0 %v1596
  %1692 = vmatpush1.bf16.msra.mxu0 %v1595
  %1693 = vmatprep.subr.bf16.mxu0 %v1598
  %1694 = vmatpush1.bf16.msra.mxu0 %v1597
  %1695 = vmatprep.subr.bf16.mxu0 %v1600
  %1696 = vmatpush1.bf16.msra.mxu0 %v1599
  %1697 = vmatprep.subr.bf16.mxu0 %v1602
  %1698 = vmatpush1.bf16.msra.mxu0 %v1601
  %1699 = vmatprep.subr.bf16.mxu0 %v1604
  %1700 = vmatpush1.bf16.msra.mxu0 %v1603
  %1701 = vmatprep.subr.bf16.mxu0 %v1606
  %1702 = vmatpush1.bf16.msra.mxu0 %v1605
  %1703 = vmatprep.subr.bf16.mxu0 %v1608
  %1704 = vmatpush1.bf16.msra.mxu0 %v1607
  %1705 = vmatprep.subr.bf16.mxu0 %v1610
  %1706 = vmatpush1.bf16.msra.mxu0 %v1609
  %1707 = vmatprep.subr.bf16.mxu0 %v1612
  %1708 = vmatpush1.bf16.msra.mxu0 %v1611
  %1709 = vmatprep.subr.bf16.mxu0 %v1614
  %1710 = vmatpush1.bf16.msra.mxu0 %v1613
  %1711 = vmatprep.subr.bf16.mxu0 %v1616
  %1712 = vmatpush1.bf16.msra.mxu0 %v1615
  %1713 = vmatprep.subr.bf16.mxu0 %v1618
  %1714 = vmatpush1.bf16.msra.mxu0 %v1617
  %1715 = vmatprep.subr.bf16.mxu0 %v1620
  %1716 = vmatpush1.bf16.msra.mxu0 %v1619
  %1717 = vmatprep.mubr.bf16.mxu0 %v1404
  %1718 = vmatmul.mubr.bf16.gmra.mrb[0].mxu0 %v1403
  %v1719 = vpop.f32.mrb[0].mxu0
  %v1720 = vadd.f32 %v1396, %v1719
  %v1721 = vpop.f32.mrb[0].mxu0
  %v1722 = vadd.f32 %v1400, %v1721
  %v1723 = vpop.f32.mrb[0].mxu0
  %v1724 = vadd.f32 %v1396, %v1723
  %v1725 = vpop.f32.mrb[0].mxu0
  %v1726 = vadd.f32 %v1400, %v1725
  %1727 = vmatprep.mubr.bf16.mxu0 %v1407
  %1728 = vmatmul.mubr.bf16.gmra.mrb[0].mxu0 %v1406
  %v1729 = vpop.f32.mrb[0].mxu0
  %v1730 = vadd.f32 %v1396, %v1729
  %v1731 = vpop.f32.mrb[0].mxu0
  %v1732 = vadd.f32 %v1400, %v1731
  %v1733 = vpop.f32.mrb[0].mxu0
  %v1734 = vadd.f32 %v1396, %v1733
  %v1735 = vpop.f32.mrb[0].mxu0
  %v1736 = vadd.f32 %v1400, %v1735
  %1737 = vmatprep.mubr.bf16.mxu0 %v1410
  %1738 = vmatmul.mubr.bf16.gmra.mrb[0].mxu0 %v1409
  %v1739 = vpop.f32.mrb[0].mxu0
  %v1740 = vadd.f32 %v1396, %v1739
  %v1741 = vpop.f32.mrb[0].mxu0
  %v1742 = vadd.f32 %v1400, %v1741
  %v1743 = vpop.f32.mrb[0].mxu0
  %v1744 = vadd.f32 %v1396, %v1743
  %v1745 = vpop.f32.mrb[0].mxu0
  %v1746 = vadd.f32 %v1400, %v1745
  %1747 = vmatprep.mubr.bf16.mxu0 %v1413
  %1748 = vmatmul.mubr.bf16.gmra.mrb[0].mxu0 %v1412
  %v1749 = vpop.f32.mrb[0].mxu0
  %v1750 = vadd.f32 %v1396, %v1749
  %v1751 = vpop.f32.mrb[0].mxu0
  %v1752 = vadd.f32 %v1400, %v1751
  %v1753 = vpop.f32.mrb[0].mxu0
  %v1754 = vadd.f32 %v1396, %v1753
  %v1755 = vpop.f32.mrb[0].mxu0
  %v1756 = vadd.f32 %v1400, %v1755
  %1757 = vmatprep.mubr.bf16.mxu0 %v1416
  %1758 = vmatmul.mubr.bf16.gmra.mrb[0].mxu0 %v1415
  %v1759 = vpop.f32.mrb[0].mxu0
  %v1760 = vadd.f32 %v1396, %v1759
  %v1761 = vpop.f32.mrb[0].mxu0
  %v1762 = vadd.f32 %v1400, %v1761
  %v1763 = vpop.f32.mrb[0].mxu0
  %v1764 = vadd.f32 %v1396, %v1763
  %v1765 = vpop.f32.mrb[0].mxu0
  %v1766 = vadd.f32 %v1400, %v1765
  %1767 = vmatprep.mubr.bf16.mxu0 %v1419
  %1768 = vmatmul.mubr.bf16.gmra.mrb[0].mxu0 %v1418
  %v1769 = vpop.f32.mrb[0].mxu0
  %v1770 = vadd.f32 %v1396, %v1769
  %v1771 = vpop.f32.mrb[0].mxu0
  %v1772 = vadd.f32 %v1400, %v1771
  %v1773 = vpop.f32.mrb[0].mxu0
  %v1774 = vadd.f32 %v1396, %v1773
  %v1775 = vpop.f32.mrb[0].mxu0
  %v1776 = vadd.f32 %v1400, %v1775
  %1777 = vmatprep.mubr.bf16.mxu0 %v1422
  %1778 = vmatmul.mubr.bf16.gmra.mrb[0].mxu0 %v1421
  %v1779 = vpop.f32.mrb[0].mxu0
  %v1780 = vadd.f32 %v1396, %v1779
  %v1781 = vpop.f32.mrb[0].mxu0
  %v1782 = vadd.f32 %v1400, %v1781
  %v1783 = vpop.f32.mrb[0].mxu0
  %v1784 = vadd.f32 %v1396, %v1783
  %v1785 = vpop.f32.mrb[0].mxu0
  %v1786 = vadd.f32 %v1400, %v1785
  %1787 = vdwg.mxu0
  %1788 = vmatprep.subr.bf16.mxu0 %v1622
  %1789 = vmatpush1.bf16.msra.mxu0 %v1621
  %1790 = vmatprep.subr.bf16.mxu0 %v1624
  %1791 = vmatpush1.bf16.msra.mxu0 %v1623
  %1792 = vmatprep.subr.bf16.mxu0 %v1626
  %1793 = vmatpush1.bf16.msra.mxu0 %v1625
  %1794 = vmatprep.subr.bf16.mxu0 %v1628
  %1795 = vmatpush1.bf16.msra.mxu0 %v1627
  %1796 = vmatprep.subr.bf16.mxu0 %v1630
  %1797 = vmatpush1.bf16.msra.mxu0 %v1629
  %1798 = vmatprep.subr.bf16.mxu0 %v1632
  %1799 = vmatpush1.bf16.msra.mxu0 %v1631
  %1800 = vmatprep.subr.bf16.mxu0 %v1634
  %1801 = vmatpush1.bf16.msra.mxu0 %v1633
  %1802 = vmatprep.subr.bf16.mxu0 %v1636
  %1803 = vmatpush1.bf16.msra.mxu0 %v1635
  %1804 = vmatprep.subr.bf16.mxu0 0
  %1805 = vmatpush1.bf16.msra.mxu0 0
  %1806 = vmatprep.subr.bf16.mxu0 0
  %1807 = vmatpush1.bf16.msra.mxu0 0
  %1808 = vmatprep.subr.bf16.mxu0 0
  %1809 = vmatpush1.bf16.msra.mxu0 0
  %1810 = vmatprep.subr.bf16.mxu0 0
  %1811 = vmatpush1.bf16.msra.mxu0 0
  %1812 = vmatprep.subr.bf16.mxu0 0
  %1813 = vmatpush1.bf16.msra.mxu0 0
  %1814 = vmatprep.subr.bf16.mxu0 0
  %1815 = vmatpush1.bf16.msra.mxu0 0
  %1816 = vmatprep.subr.bf16.mxu0 0
  %1817 = vmatpush1.bf16.msra.mxu0 0
  %1818 = vmatprep.subr.bf16.mxu0 0
  %1819 = vmatpush1.bf16.msra.mxu0 0
  %1820 = vmatprep.mubr.bf16.mxu0 0
  %1821 = vmatmul.mubr.bf16.gmra.mrb[0].mxu0 %v1405
  %v1822 = vpop.f32.mrb[0].mxu0
  %v1823 = vadd.f32 %v1720, %v1822
  %v1824 = vpop.f32.mrb[0].mxu0
  %v1825 = vadd.f32 %v1722, %v1824
  %v1826 = vpop.f32.mrb[0].mxu0
  %v1827 = vadd.f32 %v1724, %v1826
  %v1828 = vpop.f32.mrb[0].mxu0
  %v1829 = vadd.f32 %v1726, %v1828
  %1830 = vmatprep.mubr.bf16.mxu0 0
  %1831 = vmatmul.mubr.bf16.gmra.mrb[0].mxu0 %v1408
  %v1832 = vpop.f32.mrb[0].mxu0
  %v1833 = vadd.f32 %v1730, %v1832
  %v1834 = vpop.f32.mrb[0].mxu0
  %v1835 = vadd.f32 %v1732, %v1834
  %v1836 = vpop.f32.mrb[0].mxu0
  %v1837 = vadd.f32 %v1734, %v1836
  %v1838 = vpop.f32.mrb[0].mxu0
  %v1839 = vadd.f32 %v1736, %v1838
  %1840 = vmatprep.mubr.bf16.mxu0 0
  %1841 = vmatmul.mubr.bf16.gmra.mrb[0].mxu0 %v1411
  %v1842 = vpop.f32.mrb[0].mxu0
  %v1843 = vadd.f32 %v1740, %v1842
  %v1844 = vpop.f32.mrb[0].mxu0
  %v1845 = vadd.f32 %v1742, %v1844
  %v1846 = vpop.f32.mrb[0].mxu0
  %v1847 = vadd.f32 %v1744, %v1846
  %v1848 = vpop.f32.mrb[0].mxu0
  %v1849 = vadd.f32 %v1746, %v1848
  %1850 = vmatprep.mubr.bf16.mxu0 0
  %1851 = vmatmul.mubr.bf16.gmra.mrb[0].mxu0 %v1414
  %v1852 = vpop.f32.mrb[0].mxu0
  %v1853 = vadd.f32 %v1750, %v1852
  %v1854 = vpop.f32.mrb[0].mxu0
  %v1855 = vadd.f32 %v1752, %v1854
  %v1856 = vpop.f32.mrb[0].mxu0
  %v1857 = vadd.f32 %v1754, %v1856
  %v1858 = vpop.f32.mrb[0].mxu0
  %v1859 = vadd.f32 %v1756, %v1858
  %1860 = vmatprep.mubr.bf16.mxu0 0
  %1861 = vmatmul.mubr.bf16.gmra.mrb[0].mxu0 %v1417
  %v1862 = vpop.f32.mrb[0].mxu0
  %v1863 = vadd.f32 %v1760, %v1862
  %v1864 = vpop.f32.mrb[0].mxu0
  %v1865 = vadd.f32 %v1762, %v1864
  %v1866 = vpop.f32.mrb[0].mxu0
  %v1867 = vadd.f32 %v1764, %v1866
  %v1868 = vpop.f32.mrb[0].mxu0
  %v1869 = vadd.f32 %v1766, %v1868
  %1870 = vmatprep.mubr.bf16.mxu0 0
  %1871 = vmatmul.mubr.bf16.gmra.mrb[0].mxu0 %v1420
  %v1872 = vpop.f32.mrb[0].mxu0
  %v1873 = vadd.f32 %v1770, %v1872
  %v1874 = vpop.f32.mrb[0].mxu0
  %v1875 = vadd.f32 %v1772, %v1874
  %v1876 = vpop.f32.mrb[0].mxu0
  %v1877 = vadd.f32 %v1774, %v1876
  %v1878 = vpop.f32.mrb[0].mxu0
  %v1879 = vadd.f32 %v1776, %v1878
  %1880 = vmatprep.mubr.bf16.mxu0 0
  %1881 = vmatmul.mubr.bf16.gmra.mrb[0].mxu0 %v1423
  %v1882 = vpop.f32.mrb[0].mxu0
  %v1883 = vadd.f32 %v1780, %v1882
  %v1884 = vpop.f32.mrb[0].mxu0
  %v1885 = vadd.f32 %v1782, %v1884
  %v1886 = vpop.f32.mrb[0].mxu0
  %v1887 = vadd.f32 %v1784, %v1886
  %v1888 = vpop.f32.mrb[0].mxu0
  %v1889 = vadd.f32 %v1786, %v1888
  %1890 = vdwg.mxu0
  %v1891 = vmax.f32 %v1823, 0.0
  %v1892 = vmax.f32 %v1825, 0.0
  %v1893 = vmax.f32 %v1827, 0.0
  %v1894 = vmax.f32 %v1829, 0.0
  %v1895 = vmax.f32 %v1833, 0.0
  %v1896 = vmax.f32 %v1835, 0.0
  %v1897 = vmax.f32 %v1837, 0.0
  %v1898 = vmax.f32 %v1839, 0.0
  %v1899 = vmax.f32 %v1843, 0.0
  %v1900 = vmax.f32 %v1845, 0.0
  %v1901 = vmax.f32 %v1847, 0.0
  %v1902 = vmax.f32 %v1849, 0.0
  %v1903 = vmax.f32 %v1853, 0.0
  %v1904 = vmax.f32 %v1855, 0.0
  %v1905 = vmax.f32 %v1857, 0.0
  %v1906 = vmax.f32 %v1859, 0.0
  %v1907 = vmax.f32 %v1863, 0.0
  %v1908 = vmax.f32 %v1865, 0.0
  %v1909 = vmax.f32 %v1867, 0.0
  %v1910 = vmax.f32 %v1869, 0.0
  %v1911 = vmax.f32 %v1873, 0.0
  %v1912 = vmax.f32 %v1875, 0.0
  %v1913 = vmax.f32 %v1877, 0.0
  %v1914 = vmax.f32 %v1879, 0.0
  %v1915 = vmax.f32 %v1883, 0.0
  %v1916 = vmax.f32 %v1885, 0.0
  %v1917 = vmax.f32 %v1887, 0.0
  %v1918 = vmax.f32 %v1889, 0.0
  %v1919 = vmax.f32 %v1891, %v1893
  %v1920 = vmax.f32 %v1892, %v1894
  %v1921 = vmax.f32 %v1895, %v1897
  %v1922 = vmax.f32 %v1896, %v1898
  %v1923 = vmax.f32 %v1899, %v1901
  %v1924 = vmax.f32 %v1900, %v1902
  %v1925 = vmax.f32 %v1903, %v1905
  %v1926 = vmax.f32 %v1904, %v1906
  %v1927 = vmax.f32 %v1907, %v1909
  %v1928 = vmax.f32 %v1908, %v1910
  %v1929 = vmax.f32 %v1911, %v1913
  %v1930 = vmax.f32 %v1912, %v1914
  %v1931 = vmax.f32 %v1915, %v1917
  %v1932 = vmax.f32 %v1916, %v1918
  %v1933 = vpack.c.bf16 %v1921, %v1919
  %v1934 = vpack.c.bf16 %v1922, %v1920
  %v1935 = vpack.c.bf16 %v1925, %v1923
  %v1936 = vpack.c.bf16 %v1926, %v1924
  %v1937 = vpack.c.bf16 %v1929, %v1927
  %v1938 = vpack.c.bf16 %v1930, %v1928
  %v1939 = vpack.c.bf16 %v1931, %v1931
  %v1940 = vpack.c.bf16 %v1932, %v1932
  %v1941 = vld [vmem:[%s6] sm:$0xff]
  %v1942 = vld [vmem:[%s6 + $0x8] sm:$0xff]
  %v1943 = vld [vmem:[%s6 + $0x10] sm:$0xff]
  %v1944 = vld [vmem:[%s6 + $0x18] sm:$0xff]
  %v1945 = vld [vmem:[%s6 + $0x20] sm:$0xff]
  %v1946 = vld [vmem:[%s6 + $0x28] sm:$0xff]
  %v1947 = vld [vmem:[%s6 + $0x30] sm:$0xff]
  %v1948 = vld [vmem:[%s6 + $0x38] sm:$0xff]
  %v1949 = vld [vmem:[%s6 + $0x40] sm:$0xff]
  %v1950 = vld [vmem:[%s6 + $0x48] sm:$0xff]
  %v1951 = vld [vmem:[%s6 + $0x50] sm:$0xff]
  %v1952 = vld [vmem:[%s6 + $0x58] sm:$0xff]
  %v1953 = vld [vmem:[%s6 + $0x60] sm:$0xff]
  %v1954 = vld [vmem:[%s6 + $0x68] sm:$0xff]
  %v1955 = vld [vmem:[%s6 + $0x70] sm:$0xff]
  %v1956 = vld [vmem:[%s6 + $0x78] sm:$0xff]
  %v1957 = vld [vmem:[%s6 + $0x80] sm:$0xff]
  %v1958 = vld [vmem:[%s6 + $0x88] sm:$0xff]
  %v1959 = vld [vmem:[%s6 + $0x90] sm:$0xff]
  %v1960 = vld [vmem:[%s6 + $0x98] sm:$0xff]
  %v1961 = vld [vmem:[%s6 + $0xa0] sm:$0xff]
  %v1962 = vld [vmem:[%s6 + $0xa8] sm:$0xff]
  %v1963 = vld [vmem:[%s6 + $0xb0] sm:$0xff]
  %v1964 = vld [vmem:[%s6 + $0xb8] sm:$0xff]
  %v1965 = vld [vmem:[%s6 + $0xc0] sm:$0xff]
  %v1966 = vld [vmem:[%s6 + $0xc8] sm:$0xff]
  %v1967 = vld [vmem:[%s6 + $0xd0] sm:$0xff]
  %v1968 = vld [vmem:[%s6 + $0xd8] sm:$0xff]
  %v1997 = vunpack.c.l.b16 %v1941
  %v1998 = vunpack.c.h.b16 %v1941
  %v1999 = vunpack.c.l.b16 %v1942
  %v2000 = vunpack.c.h.b16 %v1942
  %v2001 = vunpack.c.l.b16 %v1943
  %v2002 = vunpack.c.h.b16 %v1943
  %v2003 = vunpack.c.l.b16 %v1944
  %v2004 = vunpack.c.h.b16 %v1944
  %v2005 = vunpack.c.l.b16 %v1945
  %v2006 = vunpack.c.h.b16 %v1945
  %v2007 = vunpack.c.l.b16 %v1946
  %v2008 = vunpack.c.h.b16 %v1946
  %v2009 = vunpack.c.l.b16 %v1947
  %v2010 = vunpack.c.h.b16 %v1947
  %v2011 = vunpack.c.l.b16 %v1948
  %v2012 = vunpack.c.h.b16 %v1948
  %v2013 = vunpack.c.l.b16 %v1949
  %v2014 = vunpack.c.h.b16 %v1949
  %v2015 = vunpack.c.l.b16 %v1950
  %v2016 = vunpack.c.h.b16 %v1950
  %v2017 = vunpack.c.l.b16 %v1951
  %v2018 = vunpack.c.h.b16 %v1951
  %v2019 = vunpack.c.l.b16 %v1952
  %v2020 = vunpack.c.h.b16 %v1952
  %v2021 = vunpack.c.l.b16 %v1953
  %v2022 = vunpack.c.h.b16 %v1953
  %v2023 = vunpack.c.l.b16 %v1954
  %v2024 = vunpack.c.h.b16 %v1954
  %v2025 = vunpack.c.l.b16 %v1955
  %v2026 = vunpack.c.h.b16 %v1955
  %v2027 = vunpack.c.l.b16 %v1956
  %v2028 = vunpack.c.h.b16 %v1956
  %v2029 = vunpack.c.l.b16 %v1957
  %v2030 = vunpack.c.h.b16 %v1957
  %v2031 = vunpack.c.l.b16 %v1958
  %v2032 = vunpack.c.h.b16 %v1958
  %v2033 = vunpack.c.l.b16 %v1959
  %v2034 = vunpack.c.h.b16 %v1959
  %v2035 = vunpack.c.l.b16 %v1960
  %v2036 = vunpack.c.h.b16 %v1960
  %v2037 = vunpack.c.l.b16 %v1961
  %v2038 = vunpack.c.h.b16 %v1961
  %v2039 = vunpack.c.l.b16 %v1962
  %v2040 = vunpack.c.h.b16 %v1962
  %v2041 = vunpack.c.l.b16 %v1963
  %v2042 = vunpack.c.h.b16 %v1963
  %v2043 = vunpack.c.l.b16 %v1964
  %v2044 = vunpack.c.h.b16 %v1964
  %v2045 = vunpack.c.l.b16 %v1965
  %v2046 = vunpack.c.h.b16 %v1965
  %v2047 = vunpack.c.l.b16 %v1966
  %v2048 = vunpack.c.h.b16 %v1966
  %v2049 = vunpack.c.l.b16 %v1967
  %v2050 = vunpack.c.h.b16 %v1967
  %v2051 = vunpack.c.l.b16 %v1968
  %v2052 = vunpack.c.h.b16 %v1968
  %v2053 = vpack.c.b16 %v1999, %v1997
  %v2054 = vpack.c.b16 %v2000, %v1998
  %v2055 = vpack.c.b16 %v2003, %v2001
  %v2056 = vpack.c.b16 %v2004, %v2002
  %v2057 = vpack.c.b16 %v2007, %v2005
  %v2058 = vpack.c.b16 %v2008, %v2006
  %v2059 = vpack.c.b16 %v2011, %v2009
  %v2060 = vpack.c.b16 %v2012, %v2010
  %v2061 = vpack.c.b16 %v2015, %v2013
  %v2062 = vpack.c.b16 %v2016, %v2014
  %v2063 = vpack.c.b16 %v2019, %v2017
  %v2064 = vpack.c.b16 %v2020, %v2018
  %v2065 = vpack.c.b16 %v2023, %v2021
  %v2066 = vpack.c.b16 %v2024, %v2022
  %v2067 = vpack.c.b16 %v2027, %v2025
  %v2068 = vpack.c.b16 %v2028, %v2026
  %v2069 = vpack.c.b16 %v2031, %v2029
  %v2070 = vpack.c.b16 %v2032, %v2030
  %v2071 = vpack.c.b16 %v2035, %v2033
  %v2072 = vpack.c.b16 %v2036, %v2034
  %v2073 = vpack.c.b16 %v2039, %v2037
  %v2074 = vpack.c.b16 %v2040, %v2038
  %v2075 = vpack.c.b16 %v2043, %v2041
  %v2076 = vpack.c.b16 %v2044, %v2042
  %v2077 = vpack.c.b16 %v2047, %v2045
  %v2078 = vpack.c.b16 %v2048, %v2046
  %v2079 = vpack.c.b16 %v2051, %v2049
  %v2080 = vpack.c.b16 %v2052, %v2050
  %v2110 = vsel %vm1045, %v1934, 0
  %v2113 = vsel %vm1045, %v1936, 0
  %v2116 = vsel %vm1045, %v1938, 0
  %v2119 = vsel %vm1045, %v1940, 0
  %2121 = vmatprep.subr.bf16.mxu0 %v2054
  %2122 = vmatpush1.bf16.msra.mxu0 %v2053
  %2123 = vmatprep.subr.bf16.mxu0 %v2056
  %2124 = vmatpush1.bf16.msra.mxu0 %v2055
  %2125 = vmatprep.subr.bf16.mxu0 %v2058
  %2126 = vmatpush1.bf16.msra.mxu0 %v2057
  %2127 = vmatprep.subr.bf16.mxu0 %v2060
  %2128 = vmatpush1.bf16.msra.mxu0 %v2059
  %2129 = vmatprep.subr.bf16.mxu0 %v2062
  %2130 = vmatpush1.bf16.msra.mxu0 %v2061
  %2131 = vmatprep.subr.bf16.mxu0 %v2064
  %2132 = vmatpush1.bf16.msra.mxu0 %v2063
  %2133 = vmatprep.subr.bf16.mxu0 %v2066
  %2134 = vmatpush1.bf16.msra.mxu0 %v2065
  %2135 = vmatprep.subr.bf16.mxu0 %v2068
  %2136 = vmatpush1.bf16.msra.mxu0 %v2067
  %2137 = vmatprep.subr.bf16.mxu0 %v2070
  %2138 = vmatpush1.bf16.msra.mxu0 %v2069
  %2139 = vmatprep.subr.bf16.mxu0 %v2072
  %2140 = vmatpush1.bf16.msra.mxu0 %v2071
  %2141 = vmatprep.subr.bf16.mxu0 %v2074
  %2142 = vmatpush1.bf16.msra.mxu0 %v2073
  %2143 = vmatprep.subr.bf16.mxu0 %v2076
  %2144 = vmatpush1.bf16.msra.mxu0 %v2075
  %2145 = vmatprep.subr.bf16.mxu0 %v2078
  %2146 = vmatpush1.bf16.msra.mxu0 %v2077
  %2147 = vmatprep.subr.bf16.mxu0 %v2080
  %2148 = vmatpush1.bf16.msra.mxu0 %v2079
  %2149 = vmatprep.subr.bf16.mxu0 0
  %2150 = vmatpush1.bf16.msra.mxu0 0
  %2151 = vmatprep.subr.bf16.mxu0 0
  %2152 = vmatpush1.bf16.msra.mxu0 0
  %2153 = vmatprep.mubr.bf16.mxu0 %v2110
  %2154 = vmatmul.mubr.bf16.gmra.mrb[0].mxu0 %v1933
  %v2155 = vpop.f32.mrb[0].mxu0
  %v2156 = vadd.f32 0.0, %v2155
  %v2157 = vpop.f32.mrb[0].mxu0
  %v2158 = vadd.f32 0.0, %v2157
  %v2159 = vpop.f32.mrb[0].mxu0
  %v2160 = vadd.f32 0.0, %v2159
  %v2161 = vpop.f32.mrb[0].mxu0
  %v2162 = vadd.f32 0.0, %v2161
  %2163 = vmatprep.mubr.bf16.mxu0 %v2113
  %2164 = vmatmul.mubr.bf16.gmra.mrb[0].mxu0 %v1935
  %v2165 = vpop.f32.mrb[0].mxu0
  %v2166 = vadd.f32 0.0, %v2165
  %v2167 = vpop.f32.mrb[0].mxu0
  %v2168 = vadd.f32 0.0, %v2167
  %v2169 = vpop.f32.mrb[0].mxu0
  %v2170 = vadd.f32 0.0, %v2169
  %v2171 = vpop.f32.mrb[0].mxu0
  %v2172 = vadd.f32 0.0, %v2171
  %2173 = vmatprep.mubr.bf16.mxu0 %v2116
  %2174 = vmatmul.mubr.bf16.gmra.mrb[0].mxu0 %v1937
  %v2175 = vpop.f32.mrb[0].mxu0
  %v2176 = vadd.f32 0.0, %v2175
  %v2177 = vpop.f32.mrb[0].mxu0
  %v2178 = vadd.f32 0.0, %v2177
  %v2179 = vpop.f32.mrb[0].mxu0
  %v2180 = vadd.f32 0.0, %v2179
  %v2181 = vpop.f32.mrb[0].mxu0
  %v2182 = vadd.f32 0.0, %v2181
  %2183 = vmatprep.mubr.bf16.mxu0 %v2119
  %2184 = vmatmul.mubr.bf16.gmra.mrb[0].mxu0 %v1939
  %v2185 = vpop.f32.mrb[0].mxu0
  %v2186 = vadd.f32 0.0, %v2185
  %v2187 = vpop.f32.mrb[0].mxu0
  %v2188 = vadd.f32 0.0, %v2187
  %v2189 = vpop.f32.mrb[0].mxu0
  %v2190 = vpop.f32.mrb[0].mxu0
  %2191 = vdwg.mxu0
  %v2192 = vmax.f32 %v2156, %v2158
  %v2193 = vmax.f32 %v2160, %v2162
  %v2194 = vmax.f32 %v2166, %v2168
  %v2195 = vmax.f32 %v2170, %v2172
  %v2196 = vmax.f32 %v2176, %v2178
  %v2197 = vmax.f32 %v2180, %v2182
  %v2198 = vmax.f32 %v2186, %v2188
  %v2199 = vpack.c.bf16 %v2192, %v2192
  %v2200 = vpack.c.bf16 %v2193, %v2193
  %v2201 = vpack.c.bf16 %v2194, %v2194
  %v2202 = vpack.c.bf16 %v2195, %v2195
  %v2203 = vpack.c.bf16 %v2196, %v2196
  %v2204 = vpack.c.bf16 %v2197, %v2197
  %v2205 = vpack.c.bf16 %v2198, %v2198
  %v2206 = vld [vmem:[%s7] sm:$0xf]
  %v2207 = vld [vmem:[%s7 + $0x4] sm:$0xf]
  %v2208 = vld [vmem:[%s7 + $0x8] sm:$0xf]
  %v2209 = vld [vmem:[%s7 + $0xc] sm:$0xf]
  %v2210 = vld [vmem:[%s7 + $0x10] sm:$0xf]
  %v2211 = vld [vmem:[%s7 + $0x14] sm:$0xf]
  %v2212 = vld [vmem:[%s7 + $0x18] sm:$0xf]
  %v2213 = vld [vmem:[%s7 + $0x1c] sm:$0xf]
  %v2214 = vld [vmem:[%s7 + $0x20] sm:$0xf]
  %v2215 = vld [vmem:[%s7 + $0x24] sm:$0xf]
  %v2216 = vld [vmem:[%s7 + $0x28] sm:$0xf]
  %v2217 = vld [vmem:[%s7 + $0x2c] sm:$0xf]
  %v2218 = vld [vmem:[%s7 + $0x30] sm:$0xf]
  %v2219 = vld [vmem:[%s7 + $0x34] sm:$0xf]
  %v2220 = vld [vmem:[%s7 + $0x38] sm:$0xf]
  %v2221 = vld [vmem:[%s7 + $0x3c] sm:$0xf]
  %v2222 = vld [vmem:[%s7 + $0x40] sm:$0xf]
  %v2223 = vld [vmem:[%s7 + $0x44] sm:$0xf]
  %v2224 = vld [vmem:[%s7 + $0x48] sm:$0xf]
  %v2225 = vld [vmem:[%s7 + $0x4c] sm:$0xf]
  %v2226 = vld [vmem:[%s7 + $0x50] sm:$0xf]
  %v2227 = vld [vmem:[%s7 + $0x54] sm:$0xf]
  %v2228 = vld [vmem:[%s7 + $0x58] sm:$0xf]
  %v2229 = vld [vmem:[%s7 + $0x5c] sm:$0xf]
  %v2230 = vld [vmem:[%s7 + $0x60] sm:$0xf]
  %v2231 = vld [vmem:[%s7 + $0x64] sm:$0xf]
  %v2232 = vld [vmem:[%s7 + $0x68] sm:$0xf]
  %v2233 = vld [vmem:[%s7 + $0x6c] sm:$0xf]
  %v2234 = vld [vmem:[%s7 + $0x70] sm:$0xf]
  %v2235 = vld [vmem:[%s7 + $0x74] sm:$0xf]
  %v2236 = vld [vmem:[%s7 + $0x78] sm:$0xf]
  %v2237 = vld [vmem:[%s7 + $0x7c] sm:$0xf]
  %v2238 = vld [vmem:[%s7 + $0x80] sm:$0xf]
  %v2239 = vld [vmem:[%s7 + $0x84] sm:$0xf]
  %v2240 = vld [vmem:[%s7 + $0x88] sm:$0xf]
  %v2241 = vld [vmem:[%s7 + $0x8c] sm:$0xf]
  %v2242 = vld [vmem:[%s7 + $0x90] sm:$0xf]
  %v2243 = vld [vmem:[%s7 + $0x94] sm:$0xf]
  %v2244 = vld [vmem:[%s7 + $0x98] sm:$0xf]
  %v2245 = vld [vmem:[%s7 + $0x9c] sm:$0xf]
  %v2246 = vld [vmem:[%s7 + $0xa0] sm:$0xf]
  %v2247 = vld [vmem:[%s7 + $0xa4] sm:$0xf]
  %v2248 = vld [vmem:[%s7 + $0xa8] sm:$0xf]
  %v2249 = vld [vmem:[%s7 + $0xac] sm:$0xf]
  %v2250 = vld [vmem:[%s7 + $0xb0] sm:$0xf]
  %v2251 = vld [vmem:[%s7 + $0xb4] sm:$0xf]
  %v2252 = vld [vmem:[%s7 + $0xb8] sm:$0xf]
  %v2253 = vld [vmem:[%s7 + $0xbc] sm:$0xf]
  %v2254 = vld [vmem:[%s7 + $0xc0] sm:$0xf]
  %v2255 = vld [vmem:[%s7 + $0xc4] sm:$0xf]
  %v2256 = vld [vmem:[%s7 + $0xc8] sm:$0xf]
  %v2257 = vld [vmem:[%s7 + $0xcc] sm:$0xf]
  %v2258 = vld [vmem:[%s7 + $0xd0] sm:$0xf]
  %v2259 = vld [vmem:[%s7 + $0xd4] sm:$0xf]
  %v2260 = vld [vmem:[%s7 + $0xd8] sm:$0xf]
  %v2261 = vld [vmem:[%s7 + $0xdc] sm:$0xf]
  %v2262 = vld [vmem:[%s7 + $0xe0] sm:$0xf]
  %v2263 = vld [vmem:[%s7 + $0xe4] sm:$0xf]
  %v2264 = vld [vmem:[%s7 + $0xe8] sm:$0xf]
  %v2265 = vld [vmem:[%s7 + $0xec] sm:$0xf]
  %v2266 = vld [vmem:[%s7 + $0xf0] sm:$0xf]
  %v2267 = vld [vmem:[%s7 + $0xf4] sm:$0xf]
  %v2268 = vld [vmem:[%s7 + $0xf8] sm:$0xf]
  %v2269 = vld [vmem:[%s7 + $0xfc] sm:$0xf]
  %v2270 = vld [vmem:[%s7 + $0x100] sm:$0xf]
  %v2271 = vld [vmem:[%s7 + $0x104] sm:$0xf]
  %v2272 = vld [vmem:[%s7 + $0x108] sm:$0xf]
  %v2273 = vld [vmem:[%s7 + $0x10c] sm:$0xf]
  %v2274 = vld [vmem:[%s7 + $0x110] sm:$0xf]
  %v2275 = vld [vmem:[%s7 + $0x114] sm:$0xf]
  %v2276 = vld [vmem:[%s7 + $0x118] sm:$0xf]
  %v2277 = vld [vmem:[%s7 + $0x11c] sm:$0xf]
  %v2278 = vld [vmem:[%s7 + $0x120] sm:$0xf]
  %v2279 = vld [vmem:[%s7 + $0x124] sm:$0xf]
  %v2280 = vld [vmem:[%s7 + $0x128] sm:$0xf]
  %v2281 = vld [vmem:[%s7 + $0x12c] sm:$0xf]
  %v2282 = vld [vmem:[%s7 + $0x130] sm:$0xf]
  %v2283 = vld [vmem:[%s7 + $0x134] sm:$0xf]
  %v2284 = vld [vmem:[%s7 + $0x138] sm:$0xf]
  %v2285 = vld [vmem:[%s7 + $0x13c] sm:$0xf]
  %v2286 = vld [vmem:[%s7 + $0x140] sm:$0xf]
  %v2287 = vld [vmem:[%s7 + $0x144] sm:$0xf]
  %v2288 = vld [vmem:[%s7 + $0x148] sm:$0xf]
  %v2289 = vld [vmem:[%s7 + $0x14c] sm:$0xf]
  %v2290 = vld [vmem:[%s7 + $0x150] sm:$0xf]
  %v2291 = vld [vmem:[%s7 + $0x154] sm:$0xf]
  %v2292 = vld [vmem:[%s7 + $0x158] sm:$0xf]
  %v2293 = vld [vmem:[%s7 + $0x15c] sm:$0xf]
  %v2294 = vld [vmem:[%s7 + $0x160] sm:$0xf]
  %v2295 = vld [vmem:[%s7 + $0x164] sm:$0xf]
  %v2296 = vld [vmem:[%s7 + $0x168] sm:$0xf]
  %v2297 = vld [vmem:[%s7 + $0x16c] sm:$0xf]
  %v2298 = vld [vmem:[%s7 + $0x170] sm:$0xf]
  %v2299 = vld [vmem:[%s7 + $0x174] sm:$0xf]
  %v2300 = vld [vmem:[%s7 + $0x178] sm:$0xf]
  %v2301 = vld [vmem:[%s7 + $0x17c] sm:$0xf]
  %v2302 = vld [vmem:[%s7 + $0x180] sm:$0xf]
  %v2303 = vld [vmem:[%s7 + $0x184] sm:$0xf]
  %v2304 = vld [vmem:[%s7 + $0x188] sm:$0xf]
  %v2305 = vld [vmem:[%s7 + $0x18c] sm:$0xf]
  %v2306 = vld [vmem:[%s7 + $0x190] sm:$0xf]
  %v2307 = vld [vmem:[%s7 + $0x194] sm:$0xf]
  %v2308 = vld [vmem:[%s7 + $0x198] sm:$0xf]
  %v2309 = vld [vmem:[%s7 + $0x19c] sm:$0xf]
  %v2310 = vld [vmem:[%s7 + $0x1a0] sm:$0xf]
  %v2311 = vld [vmem:[%s7 + $0x1a4] sm:$0xf]
  %v2312 = vld [vmem:[%s7 + $0x1a8] sm:$0xf]
  %v2313 = vld [vmem:[%s7 + $0x1ac] sm:$0xf]
  %v2314 = vld [vmem:[%s7 + $0x1b0] sm:$0xf]
  %v2315 = vld [vmem:[%s7 + $0x1b4] sm:$0xf]
  %v2316 = vld [vmem:[%s7 + $0x1b8] sm:$0xf]
  %v2317 = vld [vmem:[%s7 + $0x1bc] sm:$0xf]
  %v2318 = vld [vmem:[%s8] sm:$0x1]
  %v2320 = vlaneseq
  %v2321 = vshrl.u32 %v2320, 7
  %v2322 = vsub.s32 0, %v2321
  %v2323 = vrot.slane %v2318, %v2322
  %v2437 = vunpack.c.l.b16 %v2206
  %v2438 = vunpack.c.l.b16 %v2207
  %v2439 = vunpack.c.l.b16 %v2208
  %v2440 = vunpack.c.l.b16 %v2209
  %v2441 = vunpack.c.l.b16 %v2210
  %v2442 = vunpack.c.l.b16 %v2211
  %v2443 = vunpack.c.l.b16 %v2212
  %v2444 = vunpack.c.l.b16 %v2213
  %v2445 = vunpack.c.l.b16 %v2214
  %v2446 = vunpack.c.l.b16 %v2215
  %v2447 = vunpack.c.l.b16 %v2216
  %v2448 = vunpack.c.l.b16 %v2217
  %v2449 = vunpack.c.l.b16 %v2218
  %v2450 = vunpack.c.l.b16 %v2219
  %v2451 = vunpack.c.l.b16 %v2220
  %v2452 = vunpack.c.l.b16 %v2221
  %v2453 = vunpack.c.l.b16 %v2222
  %v2454 = vunpack.c.l.b16 %v2223
  %v2455 = vunpack.c.l.b16 %v2224
  %v2456 = vunpack.c.l.b16 %v2225
  %v2457 = vunpack.c.l.b16 %v2226
  %v2458 = vunpack.c.l.b16 %v2227
  %v2459 = vunpack.c.l.b16 %v2228
  %v2460 = vunpack.c.l.b16 %v2229
  %v2461 = vunpack.c.l.b16 %v2230
  %v2462 = vunpack.c.l.b16 %v2231
  %v2463 = vunpack.c.l.b16 %v2232
  %v2464 = vunpack.c.l.b16 %v2233
  %v2465 = vunpack.c.l.b16 %v2234
  %v2466 = vunpack.c.l.b16 %v2235
  %v2467 = vunpack.c.l.b16 %v2236
  %v2468 = vunpack.c.l.b16 %v2237
  %v2469 = vunpack.c.l.b16 %v2238
  %v2470 = vunpack.c.l.b16 %v2239
  %v2471 = vunpack.c.l.b16 %v2240
  %v2472 = vunpack.c.l.b16 %v2241
  %v2473 = vunpack.c.l.b16 %v2242
  %v2474 = vunpack.c.l.b16 %v2243
  %v2475 = vunpack.c.l.b16 %v2244
  %v2476 = vunpack.c.l.b16 %v2245
  %v2477 = vunpack.c.l.b16 %v2246
  %v2478 = vunpack.c.l.b16 %v2247
  %v2479 = vunpack.c.l.b16 %v2248
  %v2480 = vunpack.c.l.b16 %v2249
  %v2481 = vunpack.c.l.b16 %v2250
  %v2482 = vunpack.c.l.b16 %v2251
  %v2483 = vunpack.c.l.b16 %v2252
  %v2484 = vunpack.c.l.b16 %v2253
  %v2485 = vunpack.c.l.b16 %v2254
  %v2486 = vunpack.c.l.b16 %v2255
  %v2487 = vunpack.c.l.b16 %v2256
  %v2488 = vunpack.c.l.b16 %v2257
  %v2489 = vunpack.c.l.b16 %v2258
  %v2490 = vunpack.c.l.b16 %v2259
  %v2491 = vunpack.c.l.b16 %v2260
  %v2492 = vunpack.c.l.b16 %v2261
  %v2493 = vunpack.c.l.b16 %v2262
  %v2494 = vunpack.c.l.b16 %v2263
  %v2495 = vunpack.c.l.b16 %v2264
  %v2496 = vunpack.c.l.b16 %v2265
  %v2497 = vunpack.c.l.b16 %v2266
  %v2498 = vunpack.c.l.b16 %v2267
  %v2499 = vunpack.c.l.b16 %v2268
  %v2500 = vunpack.c.l.b16 %v2269
  %v2501 = vunpack.c.l.b16 %v2270
  %v2502 = vunpack.c.l.b16 %v2271
  %v2503 = vunpack.c.l.b16 %v2272
  %v2504 = vunpack.c.l.b16 %v2273
  %v2505 = vunpack.c.l.b16 %v2274
  %v2506 = vunpack.c.l.b16 %v2275
  %v2507 = vunpack.c.l.b16 %v2276
  %v2508 = vunpack.c.l.b16 %v2277
  %v2509 = vunpack.c.l.b16 %v2278
  %v2510 = vunpack.c.l.b16 %v2279
  %v2511 = vunpack.c.l.b16 %v2280
  %v2512 = vunpack.c.l.b16 %v2281
  %v2513 = vunpack.c.l.b16 %v2282
  %v2514 = vunpack.c.l.b16 %v2283
  %v2515 = vunpack.c.l.b16 %v2284
  %v2516 = vunpack.c.l.b16 %v2285
  %v2517 = vunpack.c.l.b16 %v2286
  %v2518 = vunpack.c.l.b16 %v2287
  %v2519 = vunpack.c.l.b16 %v2288
  %v2520 = vunpack.c.l.b16 %v2289
  %v2521 = vunpack.c.l.b16 %v2290
  %v2522 = vunpack.c.l.b16 %v2291
  %v2523 = vunpack.c.l.b16 %v2292
  %v2524 = vunpack.c.l.b16 %v2293
  %v2525 = vunpack.c.l.b16 %v2294
  %v2526 = vunpack.c.l.b16 %v2295
  %v2527 = vunpack.c.l.b16 %v2296
  %v2528 = vunpack.c.l.b16 %v2297
  %v2529 = vunpack.c.l.b16 %v2298
  %v2530 = vunpack.c.l.b16 %v2299
  %v2531 = vunpack.c.l.b16 %v2300
  %v2532 = vunpack.c.l.b16 %v2301
  %v2533 = vunpack.c.l.b16 %v2302
  %v2534 = vunpack.c.l.b16 %v2303
  %v2535 = vunpack.c.l.b16 %v2304
  %v2536 = vunpack.c.l.b16 %v2305
  %v2537 = vunpack.c.l.b16 %v2306
  %v2538 = vunpack.c.l.b16 %v2307
  %v2539 = vunpack.c.l.b16 %v2308
  %v2540 = vunpack.c.l.b16 %v2309
  %v2541 = vunpack.c.l.b16 %v2310
  %v2542 = vunpack.c.l.b16 %v2311
  %v2543 = vunpack.c.l.b16 %v2312
  %v2544 = vunpack.c.l.b16 %v2313
  %v2545 = vunpack.c.l.b16 %v2314
  %v2546 = vunpack.c.l.b16 %v2315
  %v2547 = vunpack.c.l.b16 %v2316
  %v2548 = vunpack.c.l.b16 %v2317
  %v2549 = vpack.c.b16 %v2438, %v2437
  %v2550 = vpack.c.b16 %v2440, %v2439
  %v2551 = vpack.c.b16 %v2442, %v2441
  %v2552 = vpack.c.b16 %v2444, %v2443
  %v2553 = vpack.c.b16 %v2446, %v2445
  %v2554 = vpack.c.b16 %v2448, %v2447
  %v2555 = vpack.c.b16 %v2450, %v2449
  %v2556 = vpack.c.b16 %v2452, %v2451
  %v2557 = vpack.c.b16 %v2454, %v2453
  %v2558 = vpack.c.b16 %v2456, %v2455
  %v2559 = vpack.c.b16 %v2458, %v2457
  %v2560 = vpack.c.b16 %v2460, %v2459
  %v2561 = vpack.c.b16 %v2462, %v2461
  %v2562 = vpack.c.b16 %v2464, %v2463
  %v2563 = vpack.c.b16 %v2466, %v2465
  %v2564 = vpack.c.b16 %v2468, %v2467
  %v2565 = vpack.c.b16 %v2470, %v2469
  %v2566 = vpack.c.b16 %v2472, %v2471
  %v2567 = vpack.c.b16 %v2474, %v2473
  %v2568 = vpack.c.b16 %v2476, %v2475
  %v2569 = vpack.c.b16 %v2478, %v2477
  %v2570 = vpack.c.b16 %v2480, %v2479
  %v2571 = vpack.c.b16 %v2482, %v2481
  %v2572 = vpack.c.b16 %v2484, %v2483
  %v2573 = vpack.c.b16 %v2486, %v2485
  %v2574 = vpack.c.b16 %v2488, %v2487
  %v2575 = vpack.c.b16 %v2490, %v2489
  %v2576 = vpack.c.b16 %v2492, %v2491
  %v2577 = vpack.c.b16 %v2494, %v2493
  %v2578 = vpack.c.b16 %v2496, %v2495
  %v2579 = vpack.c.b16 %v2498, %v2497
  %v2580 = vpack.c.b16 %v2500, %v2499
  %v2581 = vpack.c.b16 %v2502, %v2501
  %v2582 = vpack.c.b16 %v2504, %v2503
  %v2583 = vpack.c.b16 %v2506, %v2505
  %v2584 = vpack.c.b16 %v2508, %v2507
  %v2585 = vpack.c.b16 %v2510, %v2509
  %v2586 = vpack.c.b16 %v2512, %v2511
  %v2587 = vpack.c.b16 %v2514, %v2513
  %v2588 = vpack.c.b16 %v2516, %v2515
  %v2589 = vpack.c.b16 %v2518, %v2517
  %v2590 = vpack.c.b16 %v2520, %v2519
  %v2591 = vpack.c.b16 %v2522, %v2521
  %v2592 = vpack.c.b16 %v2524, %v2523
  %v2593 = vpack.c.b16 %v2526, %v2525
  %v2594 = vpack.c.b16 %v2528, %v2527
  %v2595 = vpack.c.b16 %v2530, %v2529
  %v2596 = vpack.c.b16 %v2532, %v2531
  %v2597 = vpack.c.b16 %v2534, %v2533
  %v2598 = vpack.c.b16 %v2536, %v2535
  %v2599 = vpack.c.b16 %v2538, %v2537
  %v2600 = vpack.c.b16 %v2540, %v2539
  %v2601 = vpack.c.b16 %v2542, %v2541
  %v2602 = vpack.c.b16 %v2544, %v2543
  %v2603 = vpack.c.b16 %v2546, %v2545
  %v2604 = vpack.c.b16 %v2548, %v2547
  %2661 = vmatprep.subr.bf16.mxu0 0
  %2662 = vmatpush1.bf16.msra.mxu0 %v2549
  %2663 = vmatprep.subr.bf16.mxu0 0
  %2664 = vmatpush1.bf16.msra.mxu0 %v2550
  %2665 = vmatprep.subr.bf16.mxu0 0
  %2666 = vmatpush1.bf16.msra.mxu0 %v2551
  %2667 = vmatprep.subr.bf16.mxu0 0
  %2668 = vmatpush1.bf16.msra.mxu0 %v2552
  %2669 = vmatprep.subr.bf16.mxu0 0
  %2670 = vmatpush1.bf16.msra.mxu0 %v2553
  %2671 = vmatprep.subr.bf16.mxu0 0
  %2672 = vmatpush1.bf16.msra.mxu0 %v2554
  %2673 = vmatprep.subr.bf16.mxu0 0
  %2674 = vmatpush1.bf16.msra.mxu0 %v2555
  %2675 = vmatprep.subr.bf16.mxu0 0
  %2676 = vmatpush1.bf16.msra.mxu0 %v2556
  %2677 = vmatprep.subr.bf16.mxu0 0
  %2678 = vmatpush1.bf16.msra.mxu0 %v2557
  %2679 = vmatprep.subr.bf16.mxu0 0
  %2680 = vmatpush1.bf16.msra.mxu0 %v2558
  %2681 = vmatprep.subr.bf16.mxu0 0
  %2682 = vmatpush1.bf16.msra.mxu0 %v2559
  %2683 = vmatprep.subr.bf16.mxu0 0
  %2684 = vmatpush1.bf16.msra.mxu0 %v2560
  %2685 = vmatprep.subr.bf16.mxu0 0
  %2686 = vmatpush1.bf16.msra.mxu0 %v2561
  %2687 = vmatprep.subr.bf16.mxu0 0
  %2688 = vmatpush1.bf16.msra.mxu0 %v2562
  %2689 = vmatprep.subr.bf16.mxu0 0
  %2690 = vmatpush1.bf16.msra.mxu0 %v2563
  %2691 = vmatprep.subr.bf16.mxu0 0
  %2692 = vmatpush1.bf16.msra.mxu0 %v2564
  %2693 = vmatprep.mubr.bf16.mxu0 %v2200
  %2694 = vmatmul.mubr.bf16.gmra.mrb[0].mxu0 %v2199
  %v2695 = vpop.f32.mrb[0].mxu0
  %v2696 = vadd.f32 %v2323, %v2695
  %v2697 = vpop.f32.mrb[0].mxu0
  %v2698 = vpop.f32.mrb[0].mxu0
  %v2699 = vpop.f32.mrb[0].mxu0
  %2700 = vdwg.mxu0
  %2701 = vmatprep.subr.bf16.mxu0 0
  %2702 = vmatpush1.bf16.msra.mxu0 %v2565
  %2703 = vmatprep.subr.bf16.mxu0 0
  %2704 = vmatpush1.bf16.msra.mxu0 %v2566
  %2705 = vmatprep.subr.bf16.mxu0 0
  %2706 = vmatpush1.bf16.msra.mxu0 %v2567
  %2707 = vmatprep.subr.bf16.mxu0 0
  %2708 = vmatpush1.bf16.msra.mxu0 %v2568
  %2709 = vmatprep.subr.bf16.mxu0 0
  %2710 = vmatpush1.bf16.msra.mxu0 %v2569
  %2711 = vmatprep.subr.bf16.mxu0 0
  %2712 = vmatpush1.bf16.msra.mxu0 %v2570
  %2713 = vmatprep.subr.bf16.mxu0 0
  %2714 = vmatpush1.bf16.msra.mxu0 %v2571
  %2715 = vmatprep.subr.bf16.mxu0 0
  %2716 = vmatpush1.bf16.msra.mxu0 %v2572
  %2717 = vmatprep.subr.bf16.mxu0 0
  %2718 = vmatpush1.bf16.msra.mxu0 %v2573
  %2719 = vmatprep.subr.bf16.mxu0 0
  %2720 = vmatpush1.bf16.msra.mxu0 %v2574
  %2721 = vmatprep.subr.bf16.mxu0 0
  %2722 = vmatpush1.bf16.msra.mxu0 %v2575
  %2723 = vmatprep.subr.bf16.mxu0 0
  %2724 = vmatpush1.bf16.msra.mxu0 %v2576
  %2725 = vmatprep.subr.bf16.mxu0 0
  %2726 = vmatpush1.bf16.msra.mxu0 %v2577
  %2727 = vmatprep.subr.bf16.mxu0 0
  %2728 = vmatpush1.bf16.msra.mxu0 %v2578
  %2729 = vmatprep.subr.bf16.mxu0 0
  %2730 = vmatpush1.bf16.msra.mxu0 %v2579
  %2731 = vmatprep.subr.bf16.mxu0 0
  %2732 = vmatpush1.bf16.msra.mxu0 %v2580
  %2733 = vmatprep.mubr.bf16.mxu0 %v2202
  %2734 = vmatmul.mubr.bf16.gmra.mrb[0].mxu0 %v2201
  %v2735 = vpop.f32.mrb[0].mxu0
  %v2736 = vadd.f32 %v2696, %v2735
  %v2737 = vpop.f32.mrb[0].mxu0
  %v2738 = vpop.f32.mrb[0].mxu0
  %v2739 = vpop.f32.mrb[0].mxu0
  %2740 = vdwg.mxu0
  %2741 = vmatprep.subr.bf16.mxu0 0
  %2742 = vmatpush1.bf16.msra.mxu0 %v2581
  %2743 = vmatprep.subr.bf16.mxu0 0
  %2744 = vmatpush1.bf16.msra.mxu0 %v2582
  %2745 = vmatprep.subr.bf16.mxu0 0
  %2746 = vmatpush1.bf16.msra.mxu0 %v2583
  %2747 = vmatprep.subr.bf16.mxu0 0
  %2748 = vmatpush1.bf16.msra.mxu0 %v2584
  %2749 = vmatprep.subr.bf16.mxu0 0
  %2750 = vmatpush1.bf16.msra.mxu0 %v2585
  %2751 = vmatprep.subr.bf16.mxu0 0
  %2752 = vmatpush1.bf16.msra.mxu0 %v2586
  %2753 = vmatprep.subr.bf16.mxu0 0
  %2754 = vmatpush1.bf16.msra.mxu0 %v2587
  %2755 = vmatprep.subr.bf16.mxu0 0
  %2756 = vmatpush1.bf16.msra.mxu0 %v2588
  %2757 = vmatprep.subr.bf16.mxu0 0
  %2758 = vmatpush1.bf16.msra.mxu0 %v2589
  %2759 = vmatprep.subr.bf16.mxu0 0
  %2760 = vmatpush1.bf16.msra.mxu0 %v2590
  %2761 = vmatprep.subr.bf16.mxu0 0
  %2762 = vmatpush1.bf16.msra.mxu0 %v2591
  %2763 = vmatprep.subr.bf16.mxu0 0
  %2764 = vmatpush1.bf16.msra.mxu0 %v2592
  %2765 = vmatprep.subr.bf16.mxu0 0
  %2766 = vmatpush1.bf16.msra.mxu0 %v2593
  %2767 = vmatprep.subr.bf16.mxu0 0
  %2768 = vmatpush1.bf16.msra.mxu0 %v2594
  %2769 = vmatprep.subr.bf16.mxu0 0
  %2770 = vmatpush1.bf16.msra.mxu0 %v2595
  %2771 = vmatprep.subr.bf16.mxu0 0
  %2772 = vmatpush1.bf16.msra.mxu0 %v2596
  %2773 = vmatprep.mubr.bf16.mxu0 %v2204
  %2774 = vmatmul.mubr.bf16.gmra.mrb[0].mxu0 %v2203
  %v2775 = vpop.f32.mrb[0].mxu0
  %v2776 = vadd.f32 %v2736, %v2775
  %v2777 = vpop.f32.mrb[0].mxu0
  %v2778 = vpop.f32.mrb[0].mxu0
  %v2779 = vpop.f32.mrb[0].mxu0
  %2780 = vdwg.mxu0
  %2781 = vmatprep.subr.bf16.mxu0 0
  %2782 = vmatpush1.bf16.msra.mxu0 %v2597
  %2783 = vmatprep.subr.bf16.mxu0 0
  %2784 = vmatpush1.bf16.msra.mxu0 %v2598
  %2785 = vmatprep.subr.bf16.mxu0 0
  %2786 = vmatpush1.bf16.msra.mxu0 %v2599
  %2787 = vmatprep.subr.bf16.mxu0 0
  %2788 = vmatpush1.bf16.msra.mxu0 %v2600
  %2789 = vmatprep.subr.bf16.mxu0 0
  %2790 = vmatpush1.bf16.msra.mxu0 %v2601
  %2791 = vmatprep.subr.bf16.mxu0 0
  %2792 = vmatpush1.bf16.msra.mxu0 %v2602
  %2793 = vmatprep.subr.bf16.mxu0 0
  %2794 = vmatpush1.bf16.msra.mxu0 %v2603
  %2795 = vmatprep.subr.bf16.mxu0 0
  %2796 = vmatpush1.bf16.msra.mxu0 %v2604
  %2797 = vmatprep.subr.bf16.mxu0 0
  %2798 = vmatpush1.bf16.msra.mxu0 0
  %2799 = vmatprep.subr.bf16.mxu0 0
  %2800 = vmatpush1.bf16.msra.mxu0 0
  %2801 = vmatprep.subr.bf16.mxu0 0
  %2802 = vmatpush1.bf16.msra.mxu0 0
  %2803 = vmatprep.subr.bf16.mxu0 0
  %2804 = vmatpush1.bf16.msra.mxu0 0
  %2805 = vmatprep.subr.bf16.mxu0 0
  %2806 = vmatpush1.bf16.msra.mxu0 0
  %2807 = vmatprep.subr.bf16.mxu0 0
  %2808 = vmatpush1.bf16.msra.mxu0 0
  %2809 = vmatprep.subr.bf16.mxu0 0
  %2810 = vmatpush1.bf16.msra.mxu0 0
  %2811 = vmatprep.subr.bf16.mxu0 0
  %2812 = vmatpush1.bf16.msra.mxu0 0
  %2813 = vmatprep.mubr.bf16.mxu0 0
  %2814 = vmatmul.mubr.bf16.gmra.mrb[0].mxu0 %v2205
  %v2815 = vpop.f32.mrb[0].mxu0
  %v2816 = vadd.f32 %v2776, %v2815
  %v2817 = vpop.f32.mrb[0].mxu0
  %v2818 = vpop.f32.mrb[0].mxu0
  %v2819 = vpop.f32.mrb[0].mxu0
  %2820 = vdwg.mxu0
  %2821 = vst [vmem:[%s9] sm:$0xff] %v2816
  // Predicated region
  $region38: #{cnn_forward.1} parent=0 // pred_check
    _
  $region39: #{cnn_forward.1} parent=0 // pred_check_branch
    %2823 = sbr.rel (0) target = $region41
  $region40: #{cnn_forward.1} parent=0 // pred_region
    _
  $region41: #{cnn_forward.1} parent=0 // pred_fallthru
    _
  // Predicated region
  $region42: #{cnn_forward.1} parent=0 // pred_check
    _
  $region43: #{cnn_forward.1} parent=0 // pred_check_branch
    %2825 = sbr.rel (0) target = $region45
  $region44: #{cnn_forward.1} parent=0 // pred_region
    _
  $region45: #{cnn_forward.1} parent=0 // pred_fallthru
    _

</llo_original>
